<compile_context>
chip_gen: v7x
topology: tpu7x:2x2x1
jax: 0.10.0
libtpu: 0.0.40
codegen_flags: <defaults>
</compile_context>

<pallas_src>
import functools

import jax
import jax.numpy as jnp
import numpy as np
from jax.experimental import pallas as pl
from jax.experimental.pallas import tpu as pltpu

# Small, lane-friendly stand-ins for the module's constants.
EMBEDDING_DIM = 32     # BERT hidden size stand-in (768 in the original)
NUM_FILTERS = 128      # dp_cnn_num_filters stand-in (250 original); lane-dense
NUM_CLASSES = 4
FC_PAD = 128           # lane-dense padded FC width; sliced to NUM_CLASSES outside


# --------------------------------------------------------------------------
# Single fused kernel: whole DPCNN forward (conv_region -> convs -> blocks -> fc)
# --------------------------------------------------------------------------
def _dpcnn_kernel(win_ref, wr_ref, br_ref, wc_ref, bc_ref, wfc_ref, bfc_ref,
                  out_ref, *, seq_len, batch):
    B = batch
    F_ = bc_ref.shape[-1]

    # Load every weight exactly once; they stay VMEM/vreg resident for all
    # unrolled stages (no per-stage ref re-reads).
    wr = wr_ref[...]                              # [3E, F]   bf16 (region taps stacked on K)
    br = br_ref[...]                              # [1, F]    f32
    wc = [wc_ref[k] for k in range(3)]            # 3 x [F,F] bf16 (conv taps)
    bc = bc_ref[...]                              # [1, F]    f32

    zeros_b = jnp.zeros((B, F_), jnp.float32)

    def relu_pad1(x):
        # ReLU + ZeroPad2d((0,0,1,1)); relu/pad commute since relu(0)=0.
        return jnp.concatenate([zeros_b, jnp.maximum(x, 0.0), zeros_b], axis=0)

    def conv3(xp, h_out):
        # Conv2d(F, F, (3,1)) on the stacked [(h_out+2)*B, F] activation:
        # three sublane-shifted matmuls (M = h_out*B) into one f32 accumulator.
        m = h_out * B
        acc = jnp.dot(xp[0:m].astype(jnp.bfloat16), wc[0],
                      preferred_element_type=jnp.float32)
        acc = acc + jnp.dot(xp[B:B + m].astype(jnp.bfloat16), wc[1],
                            preferred_element_type=jnp.float32)
        acc = acc + jnp.dot(xp[2 * B:2 * B + m].astype(jnp.bfloat16), wc[2],
                            preferred_element_type=jnp.float32)
        return acc + bc

    def pool_block(x, h):
        # ZeroPad2d((0,0,0,1)) then MaxPool2d((3,1), stride=2) on stacked rows.
        xp = jnp.concatenate([x, zeros_b], axis=0)       # [(h+1)*B, F]
        h_out = (h + 1 - 3) // 2 + 1
        parts = []
        for t in range(h_out):
            r = 2 * t * B
            parts.append(jnp.maximum(
                jnp.maximum(xp[r:r + B], xp[r + B:r + 2 * B]),
                xp[r + 2 * B:r + 3 * B]))
        px = parts[0] if h_out == 1 else jnp.concatenate(parts, axis=0)
        return px, h_out

    h = seq_len - 2
    # conv_region: one [(S-2)*B, 3E] x [3E, F] matmul (im2col built wrapper-side).
    x = jnp.dot(win_ref[...], wr, preferred_element_type=jnp.float32) + br
    x = conv3(relu_pad1(x), h)
    x = conv3(relu_pad1(x), h)
    while h > 2:                    # static trip count -> fully unrolled at trace time
        px, h = pool_block(x, h)
        y = conv3(relu_pad1(px), h)
        y = conv3(relu_pad1(y), h)
        x = y + px

    # x.squeeze(): the pyramid bottoms out at a single row (asserted in the
    # wrapper), so x is already [B, F]. FC is lane-padded to 128 outputs
    # (unmasked store); the real classes are sliced outside the kernel.
    out_ref[...] = (jnp.dot(x.astype(jnp.bfloat16), wfc_ref[...],
                            preferred_element_type=jnp.float32)
                    + bfc_ref[...]).astype(out_ref.dtype)


def dpcnn_forward(encoder_out, params):
    """encoder_out: [B, S, EMBEDDING_DIM] (batch_first BERT output)."""
    B, S, E = encoder_out.shape
    F_ = NUM_FILTERS
    C = NUM_CLASSES

    # The PyTorch `x.squeeze()` -> `fc` only works if the pyramid reaches a
    # single row; verify for the given S (holds for S=8).
    h = S - 2
    while h > 2:
        h = (h + 1 - 3) // 2 + 1
    assert h == 1, f"sequence length {S} does not reduce to a single row"

    # Time-major, sublane-stacked encoder rows: row index = t*B + b.
    enc_s = jnp.transpose(encoder_out, (1, 0, 2)).reshape(S * B, E)
    enc_s = enc_s.astype(jnp.float32)
    # im2col for conv_region: window row t*B+b = [enc[t,b], enc[t+1,b], enc[t+2,b]].
    win = jnp.concatenate([enc_s[0:(S - 2) * B],
                           enc_s[B:(S - 1) * B],
                           enc_s[2 * B:S * B]], axis=-1).astype(jnp.bfloat16)

    # One-time weight re-layouts (PyTorch conv layout -> matmul-friendly, bf16 MXU operands).
    wr = jnp.transpose(params["w_region"][:, 0, :, :], (1, 2, 0))          # [3, E, F]
    wr = wr.reshape(3 * E, F_).astype(jnp.bfloat16)                        # [3E, F]
    br = params["b_region"].reshape(1, F_).astype(jnp.float32)
    wc = jnp.transpose(params["w_conv"][:, :, :, 0], (2, 1, 0))            # [3, F, F]
    wc = wc.astype(jnp.bfloat16)
    bc = params["b_conv"].reshape(1, F_).astype(jnp.float32)
    wfc = jnp.zeros((F_, FC_PAD), jnp.float32).at[:, :C].set(params["w_fc"].T)
    wfc = wfc.astype(jnp.bfloat16)                                         # [F, 128]
    bfc = jnp.zeros((1, FC_PAD), jnp.float32).at[:, :C].set(params["b_fc"][None, :])

    kernel = functools.partial(_dpcnn_kernel, seq_len=S, batch=B)
    out_padded = pl.pallas_call(
        kernel,
        out_shape=jax.ShapeDtypeStruct((B, FC_PAD), jnp.float32),
        compiler_params=pltpu.CompilerParams(vmem_limit_bytes=32 * 1024 * 1024),
    )(win, wr, br, wc, bc, wfc, bfc)
    return out_padded[:, :C]


# --------------------------------------------------------------------------
# Parameter init (deterministic, PyTorch-like uniform(-1/sqrt(fan_in), ...))
# --------------------------------------------------------------------------
def init_params(key):
    F_, E, C = NUM_FILTERS, EMBEDDING_DIM, NUM_CLASSES
    ks = jax.random.split(key, 6)
    kr = 1.0 / np.sqrt(1 * 3 * E)
    kc = 1.0 / np.sqrt(F_ * 3 * 1)
    kf = 1.0 / np.sqrt(F_)
    return {
        "w_region": jax.random.uniform(ks[0], (F_, 1, 3, E), jnp.float32, -kr, kr),
        "b_region": jax.random.uniform(ks[1], (F_,), jnp.float32, -kr, kr),
        "w_conv":   jax.random.uniform(ks[2], (F_, F_, 3, 1), jnp.float32, -kc, kc),
        "b_conv":   jax.random.uniform(ks[3], (F_,), jnp.float32, -kc, kc),
        "w_fc":     jax.random.uniform(ks[4], (C, F_), jnp.float32, -kf, kf),
        "b_fc":     jax.random.uniform(ks[5], (C,), jnp.float32, -kf, kf),
    }


# --------------------------------------------------------------------------
# Pure-JAX reference (lax.conv / reduce_window, f32 HIGHEST) for correctness
# --------------------------------------------------------------------------
def dpcnn_reference(encoder_out, params):
    dn = ("NCHW", "OIHW", "NCHW")
    prec = jax.lax.Precision.HIGHEST

    def conv(x, w, b):
        y = jax.lax.conv_general_dilated(x, w, window_strides=(1, 1),
                                         padding="VALID",
                                         dimension_numbers=dn,
                                         precision=prec)
        return y + b[None, :, None, None]

    def padding1(x):
        return jnp.pad(x, ((0, 0), (0, 0), (1, 1), (0, 0)))

    def padding2(x):
        return jnp.pad(x, ((0, 0), (0, 0), (0, 1), (0, 0)))

    def max_pool(x):
        return jax.lax.reduce_window(x, -jnp.inf, jax.lax.max,
                                     (1, 1, 3, 1), (1, 1, 2, 1), "VALID")

    x = encoder_out[:, None, :, :].astype(jnp.float32)        # [B, 1, S, E]
    x = conv(x, params["w_region"], params["b_region"])       # [B, F, S-2, 1]
    x = conv(jax.nn.relu(padding1(x)), params["w_conv"], params["b_conv"])
    x = conv(jax.nn.relu(padding1(x)), params["w_conv"], params["b_conv"])
    while x.shape[2] > 2:
        px = max_pool(padding2(x))
        y = conv(jax.nn.relu(padding1(px)), params["w_conv"], params["b_conv"])
        y = conv(jax.nn.relu(padding1(y)), params["w_conv"], params["b_conv"])
        x = y + px
    x = jnp.squeeze(x, axis=(2, 3))                            # [B, F]
    return jnp.dot(x, params["w_fc"].T, precision=prec) + params["b_fc"]


if __name__ == "__main__":
    B, S = 2, 8
    key = jax.random.PRNGKey(0)
    k_x, k_p = jax.random.split(key)

    # Stand-in for the frozen BERT encoder output (see TODO at top).
    encoder_out = jax.random.normal(k_x, (B, S, EMBEDDING_DIM), jnp.float32)
    params = init_params(k_p)

    out = jax.block_until_ready(dpcnn_forward(encoder_out, params))
    ref = jax.block_until_ready(dpcnn_reference(encoder_out, params))

    # Kernel uses bf16 MXU operands with f32 accumulation; compare against the
    # f32 (HIGHEST precision) reference with a bf16-appropriate tolerance.
    np.testing.assert_allclose(np.asarray(out), np.asarray(ref),
                               rtol=2e-2, atol=2e-2)
    assert out.shape == (B, NUM_CLASSES)
    print("KERNEL_OK")
</pallas_src>

<mosaic_0001>
module attributes {stable_mosaic.version = 11 : i64} {
  func.func @_dpcnn_kernel(%arg0: memref<12x96xbf16, #tpu.memory_space<vmem>>, %arg1: memref<96x128xbf16, #tpu.memory_space<vmem>>, %arg2: memref<1x128xf32, #tpu.memory_space<vmem>>, %arg3: memref<3x128x128xbf16, #tpu.memory_space<vmem>>, %arg4: memref<1x128xf32, #tpu.memory_space<vmem>>, %arg5: memref<128x128xbf16, #tpu.memory_space<vmem>>, %arg6: memref<1x128xf32, #tpu.memory_space<vmem>>, %arg7: memref<2x128xf32, #tpu.memory_space<vmem>>) attributes {dimension_semantics = [], scalar_prefetch = 0 : i64, scratch_operands = 0 : i64, tpu.core_type = #tpu.core_type<tc>} {
    %c0 = arith.constant 0 : index
    %c0_0 = arith.constant 0 : index
    %0 = vector.load %arg1[%c0, %c0_0] : memref<96x128xbf16, #tpu.memory_space<vmem>>, vector<96x128xbf16>
    %c0_1 = arith.constant 0 : index
    %c0_2 = arith.constant 0 : index
    %1 = vector.load %arg2[%c0_1, %c0_2] : memref<1x128xf32, #tpu.memory_space<vmem>>, vector<1x128xf32>
    %c0_3 = arith.constant 0 : index
    %c0_4 = arith.constant 0 : index
    %c0_5 = arith.constant 0 : index
    %2 = vector.load %arg3[%c0_3, %c0_4, %c0_5] : memref<3x128x128xbf16, #tpu.memory_space<vmem>>, vector<1x128x128xbf16>
    %3 = vector.shape_cast %2 : vector<1x128x128xbf16> to vector<128x128xbf16>
    %c1 = arith.constant 1 : index
    %c0_6 = arith.constant 0 : index
    %c0_7 = arith.constant 0 : index
    %4 = vector.load %arg3[%c1, %c0_6, %c0_7] : memref<3x128x128xbf16, #tpu.memory_space<vmem>>, vector<1x128x128xbf16>
    %5 = vector.shape_cast %4 : vector<1x128x128xbf16> to vector<128x128xbf16>
    %c2 = arith.constant 2 : index
    %c0_8 = arith.constant 0 : index
    %c0_9 = arith.constant 0 : index
    %6 = vector.load %arg3[%c2, %c0_8, %c0_9] : memref<3x128x128xbf16, #tpu.memory_space<vmem>>, vector<1x128x128xbf16>
    %7 = vector.shape_cast %6 : vector<1x128x128xbf16> to vector<128x128xbf16>
    %c0_10 = arith.constant 0 : index
    %c0_11 = arith.constant 0 : index
    %8 = vector.load %arg4[%c0_10, %c0_11] : memref<1x128xf32, #tpu.memory_space<vmem>>, vector<1x128xf32>
    %cst = arith.constant 0.000000e+00 : f32
    %9 = vector.broadcast %cst : f32 to vector<2x128xf32>
    %c0_12 = arith.constant 0 : index
    %c0_13 = arith.constant 0 : index
    %10 = vector.load %arg0[%c0_12, %c0_13] : memref<12x96xbf16, #tpu.memory_space<vmem>>, vector<12x96xbf16>
    %cst_14 = arith.constant dense<0.000000e+00> : vector<12x128xf32>
    %11 = tpu.matmul %10, %0, %cst_14 {dimension_numbers = #tpu.dot_dimension_numbers<[1], [0], [0], [1], [0, 0, 1, 1], [], []>} : vector<12x96xbf16>, vector<96x128xbf16>, vector<12x128xf32> -> vector<12x128xf32>
    %12 = vector.broadcast %1 : vector<1x128xf32> to vector<12x128xf32>
    %13 = arith.addf %11, %12 : vector<12x128xf32>
    %cst_15 = arith.constant 0.000000e+00 : f32
    %14 = vector.broadcast %cst_15 : f32 to vector<12x128xf32>
    %15 = arith.maximumf %13, %14 : vector<12x128xf32>
    %16 = tpu.concatenate %9, %15, %9 in 0 : vector<2x128xf32>, vector<12x128xf32>, vector<2x128xf32> -> vector<16x128xf32>
    %17 = vector.extract_strided_slice %16 {offsets = [0, 0], sizes = [12, 128], strides = [1, 1]} : vector<16x128xf32> to vector<12x128xf32>
    %18 = arith.truncf %17 : vector<12x128xf32> to vector<12x128xbf16>
    %cst_16 = arith.constant dense<0.000000e+00> : vector<12x128xf32>
    %19 = tpu.matmul %18, %3, %cst_16 {dimension_numbers = #tpu.dot_dimension_numbers<[1], [0], [0], [1], [0, 0, 1, 1], [], []>} : vector<12x128xbf16>, vector<128x128xbf16>, vector<12x128xf32> -> vector<12x128xf32>
    %20 = vector.extract_strided_slice %16 {offsets = [2, 0], sizes = [12, 128], strides = [1, 1]} : vector<16x128xf32> to vector<12x128xf32>
    %21 = arith.truncf %20 : vector<12x128xf32> to vector<12x128xbf16>
    %cst_17 = arith.constant dense<0.000000e+00> : vector<12x128xf32>
    %22 = tpu.matmul %21, %5, %cst_17 {dimension_numbers = #tpu.dot_dimension_numbers<[1], [0], [0], [1], [0, 0, 1, 1], [], []>} : vector<12x128xbf16>, vector<128x128xbf16>, vector<12x128xf32> -> vector<12x128xf32>
    %23 = arith.addf %19, %22 : vector<12x128xf32>
    %24 = vector.extract_strided_slice %16 {offsets = [4, 0], sizes = [12, 128], strides = [1, 1]} : vector<16x128xf32> to vector<12x128xf32>
    %25 = arith.truncf %24 : vector<12x128xf32> to vector<12x128xbf16>
    %cst_18 = arith.constant dense<0.000000e+00> : vector<12x128xf32>
    %26 = tpu.matmul %25, %7, %cst_18 {dimension_numbers = #tpu.dot_dimension_numbers<[1], [0], [0], [1], [0, 0, 1, 1], [], []>} : vector<12x128xbf16>, vector<128x128xbf16>, vector<12x128xf32> -> vector<12x128xf32>
    %27 = arith.addf %23, %26 : vector<12x128xf32>
    %28 = vector.broadcast %8 : vector<1x128xf32> to vector<12x128xf32>
    %29 = arith.addf %27, %28 : vector<12x128xf32>
    %cst_19 = arith.constant 0.000000e+00 : f32
    %30 = vector.broadcast %cst_19 : f32 to vector<12x128xf32>
    %31 = arith.maximumf %29, %30 : vector<12x128xf32>
    %32 = tpu.concatenate %9, %31, %9 in 0 : vector<2x128xf32>, vector<12x128xf32>, vector<2x128xf32> -> vector<16x128xf32>
    %33 = vector.extract_strided_slice %32 {offsets = [0, 0], sizes = [12, 128], strides = [1, 1]} : vector<16x128xf32> to vector<12x128xf32>
    %34 = arith.truncf %33 : vector<12x128xf32> to vector<12x128xbf16>
    %cst_20 = arith.constant dense<0.000000e+00> : vector<12x128xf32>
    %35 = tpu.matmul %34, %3, %cst_20 {dimension_numbers = #tpu.dot_dimension_numbers<[1], [0], [0], [1], [0, 0, 1, 1], [], []>} : vector<12x128xbf16>, vector<128x128xbf16>, vector<12x128xf32> -> vector<12x128xf32>
    %36 = vector.extract_strided_slice %32 {offsets = [2, 0], sizes = [12, 128], strides = [1, 1]} : vector<16x128xf32> to vector<12x128xf32>
    %37 = arith.truncf %36 : vector<12x128xf32> to vector<12x128xbf16>
    %cst_21 = arith.constant dense<0.000000e+00> : vector<12x128xf32>
    %38 = tpu.matmul %37, %5, %cst_21 {dimension_numbers = #tpu.dot_dimension_numbers<[1], [0], [0], [1], [0, 0, 1, 1], [], []>} : vector<12x128xbf16>, vector<128x128xbf16>, vector<12x128xf32> -> vector<12x128xf32>
    %39 = arith.addf %35, %38 : vector<12x128xf32>
    %40 = vector.extract_strided_slice %32 {offsets = [4, 0], sizes = [12, 128], strides = [1, 1]} : vector<16x128xf32> to vector<12x128xf32>
    %41 = arith.truncf %40 : vector<12x128xf32> to vector<12x128xbf16>
    %cst_22 = arith.constant dense<0.000000e+00> : vector<12x128xf32>
    %42 = tpu.matmul %41, %7, %cst_22 {dimension_numbers = #tpu.dot_dimension_numbers<[1], [0], [0], [1], [0, 0, 1, 1], [], []>} : vector<12x128xbf16>, vector<128x128xbf16>, vector<12x128xf32> -> vector<12x128xf32>
    %43 = arith.addf %39, %42 : vector<12x128xf32>
    %44 = vector.broadcast %8 : vector<1x128xf32> to vector<12x128xf32>
    %45 = arith.addf %43, %44 : vector<12x128xf32>
    %46 = tpu.concatenate %45, %9 in 0 : vector<12x128xf32>, vector<2x128xf32> -> vector<14x128xf32>
    %47 = vector.extract_strided_slice %46 {offsets = [0, 0], sizes = [2, 128], strides = [1, 1]} : vector<14x128xf32> to vector<2x128xf32>
    %48 = vector.extract_strided_slice %46 {offsets = [2, 0], sizes = [2, 128], strides = [1, 1]} : vector<14x128xf32> to vector<2x128xf32>
    %49 = arith.maximumf %47, %48 : vector<2x128xf32>
    %50 = vector.extract_strided_slice %46 {offsets = [4, 0], sizes = [2, 128], strides = [1, 1]} : vector<14x128xf32> to vector<2x128xf32>
    %51 = arith.maximumf %49, %50 : vector<2x128xf32>
    %52 = vector.extract_strided_slice %46 {offsets = [4, 0], sizes = [2, 128], strides = [1, 1]} : vector<14x128xf32> to vector<2x128xf32>
    %53 = vector.extract_strided_slice %46 {offsets = [6, 0], sizes = [2, 128], strides = [1, 1]} : vector<14x128xf32> to vector<2x128xf32>
    %54 = arith.maximumf %52, %53 : vector<2x128xf32>
    %55 = vector.extract_strided_slice %46 {offsets = [8, 0], sizes = [2, 128], strides = [1, 1]} : vector<14x128xf32> to vector<2x128xf32>
    %56 = arith.maximumf %54, %55 : vector<2x128xf32>
    %57 = vector.extract_strided_slice %46 {offsets = [8, 0], sizes = [2, 128], strides = [1, 1]} : vector<14x128xf32> to vector<2x128xf32>
    %58 = vector.extract_strided_slice %46 {offsets = [10, 0], sizes = [2, 128], strides = [1, 1]} : vector<14x128xf32> to vector<2x128xf32>
    %59 = arith.maximumf %57, %58 : vector<2x128xf32>
    %60 = vector.extract_strided_slice %46 {offsets = [12, 0], sizes = [2, 128], strides = [1, 1]} : vector<14x128xf32> to vector<2x128xf32>
    %61 = arith.maximumf %59, %60 : vector<2x128xf32>
    %62 = tpu.concatenate %51, %56, %61 in 0 : vector<2x128xf32>, vector<2x128xf32>, vector<2x128xf32> -> vector<6x128xf32>
    %cst_23 = arith.constant 0.000000e+00 : f32
    %63 = vector.broadcast %cst_23 : f32 to vector<6x128xf32>
    %64 = arith.maximumf %62, %63 : vector<6x128xf32>
    %65 = tpu.concatenate %9, %64, %9 in 0 : vector<2x128xf32>, vector<6x128xf32>, vector<2x128xf32> -> vector<10x128xf32>
    %66 = vector.extract_strided_slice %65 {offsets = [0, 0], sizes = [6, 128], strides = [1, 1]} : vector<10x128xf32> to vector<6x128xf32>
    %67 = arith.truncf %66 : vector<6x128xf32> to vector<6x128xbf16>
    %cst_24 = arith.constant dense<0.000000e+00> : vector<6x128xf32>
    %68 = tpu.matmul %67, %3, %cst_24 {dimension_numbers = #tpu.dot_dimension_numbers<[1], [0], [0], [1], [0, 0, 1, 1], [], []>} : vector<6x128xbf16>, vector<128x128xbf16>, vector<6x128xf32> -> vector<6x128xf32>
    %69 = vector.extract_strided_slice %65 {offsets = [2, 0], sizes = [6, 128], strides = [1, 1]} : vector<10x128xf32> to vector<6x128xf32>
    %70 = arith.truncf %69 : vector<6x128xf32> to vector<6x128xbf16>
    %cst_25 = arith.constant dense<0.000000e+00> : vector<6x128xf32>
    %71 = tpu.matmul %70, %5, %cst_25 {dimension_numbers = #tpu.dot_dimension_numbers<[1], [0], [0], [1], [0, 0, 1, 1], [], []>} : vector<6x128xbf16>, vector<128x128xbf16>, vector<6x128xf32> -> vector<6x128xf32>
    %72 = arith.addf %68, %71 : vector<6x128xf32>
    %73 = vector.extract_strided_slice %65 {offsets = [4, 0], sizes = [6, 128], strides = [1, 1]} : vector<10x128xf32> to vector<6x128xf32>
    %74 = arith.truncf %73 : vector<6x128xf32> to vector<6x128xbf16>
    %cst_26 = arith.constant dense<0.000000e+00> : vector<6x128xf32>
    %75 = tpu.matmul %74, %7, %cst_26 {dimension_numbers = #tpu.dot_dimension_numbers<[1], [0], [0], [1], [0, 0, 1, 1], [], []>} : vector<6x128xbf16>, vector<128x128xbf16>, vector<6x128xf32> -> vector<6x128xf32>
    %76 = arith.addf %72, %75 : vector<6x128xf32>
    %77 = vector.broadcast %8 : vector<1x128xf32> to vector<6x128xf32>
    %78 = arith.addf %76, %77 : vector<6x128xf32>
    %cst_27 = arith.constant 0.000000e+00 : f32
    %79 = vector.broadcast %cst_27 : f32 to vector<6x128xf32>
    %80 = arith.maximumf %78, %79 : vector<6x128xf32>
    %81 = tpu.concatenate %9, %80, %9 in 0 : vector<2x128xf32>, vector<6x128xf32>, vector<2x128xf32> -> vector<10x128xf32>
    %82 = vector.extract_strided_slice %81 {offsets = [0, 0], sizes = [6, 128], strides = [1, 1]} : vector<10x128xf32> to vector<6x128xf32>
    %83 = arith.truncf %82 : vector<6x128xf32> to vector<6x128xbf16>
    %cst_28 = arith.constant dense<0.000000e+00> : vector<6x128xf32>
    %84 = tpu.matmul %83, %3, %cst_28 {dimension_numbers = #tpu.dot_dimension_numbers<[1], [0], [0], [1], [0, 0, 1, 1], [], []>} : vector<6x128xbf16>, vector<128x128xbf16>, vector<6x128xf32> -> vector<6x128xf32>
    %85 = vector.extract_strided_slice %81 {offsets = [2, 0], sizes = [6, 128], strides = [1, 1]} : vector<10x128xf32> to vector<6x128xf32>
    %86 = arith.truncf %85 : vector<6x128xf32> to vector<6x128xbf16>
    %cst_29 = arith.constant dense<0.000000e+00> : vector<6x128xf32>
    %87 = tpu.matmul %86, %5, %cst_29 {dimension_numbers = #tpu.dot_dimension_numbers<[1], [0], [0], [1], [0, 0, 1, 1], [], []>} : vector<6x128xbf16>, vector<128x128xbf16>, vector<6x128xf32> -> vector<6x128xf32>
    %88 = arith.addf %84, %87 : vector<6x128xf32>
    %89 = vector.extract_strided_slice %81 {offsets = [4, 0], sizes = [6, 128], strides = [1, 1]} : vector<10x128xf32> to vector<6x128xf32>
    %90 = arith.truncf %89 : vector<6x128xf32> to vector<6x128xbf16>
    %cst_30 = arith.constant dense<0.000000e+00> : vector<6x128xf32>
    %91 = tpu.matmul %90, %7, %cst_30 {dimension_numbers = #tpu.dot_dimension_numbers<[1], [0], [0], [1], [0, 0, 1, 1], [], []>} : vector<6x128xbf16>, vector<128x128xbf16>, vector<6x128xf32> -> vector<6x128xf32>
    %92 = arith.addf %88, %91 : vector<6x128xf32>
    %93 = vector.broadcast %8 : vector<1x128xf32> to vector<6x128xf32>
    %94 = arith.addf %92, %93 : vector<6x128xf32>
    %95 = arith.addf %94, %62 : vector<6x128xf32>
    %96 = tpu.concatenate %95, %9 in 0 : vector<6x128xf32>, vector<2x128xf32> -> vector<8x128xf32>
    %97 = vector.extract_strided_slice %96 {offsets = [0, 0], sizes = [2, 128], strides = [1, 1]} : vector<8x128xf32> to vector<2x128xf32>
    %98 = vector.extract_strided_slice %96 {offsets = [2, 0], sizes = [2, 128], strides = [1, 1]} : vector<8x128xf32> to vector<2x128xf32>
    %99 = arith.maximumf %97, %98 : vector<2x128xf32>
    %100 = vector.extract_strided_slice %96 {offsets = [4, 0], sizes = [2, 128], strides = [1, 1]} : vector<8x128xf32> to vector<2x128xf32>
    %101 = arith.maximumf %99, %100 : vector<2x128xf32>
    %cst_31 = arith.constant 0.000000e+00 : f32
    %102 = vector.broadcast %cst_31 : f32 to vector<2x128xf32>
    %103 = arith.maximumf %101, %102 : vector<2x128xf32>
    %104 = tpu.concatenate %9, %103, %9 in 0 : vector<2x128xf32>, vector<2x128xf32>, vector<2x128xf32> -> vector<6x128xf32>
    %105 = vector.extract_strided_slice %104 {offsets = [0, 0], sizes = [2, 128], strides = [1, 1]} : vector<6x128xf32> to vector<2x128xf32>
    %106 = arith.truncf %105 : vector<2x128xf32> to vector<2x128xbf16>
    %cst_32 = arith.constant dense<0.000000e+00> : vector<2x128xf32>
    %107 = tpu.matmul %106, %3, %cst_32 {dimension_numbers = #tpu.dot_dimension_numbers<[1], [0], [0], [1], [0, 0, 1, 1], [], []>} : vector<2x128xbf16>, vector<128x128xbf16>, vector<2x128xf32> -> vector<2x128xf32>
    %108 = vector.extract_strided_slice %104 {offsets = [2, 0], sizes = [2, 128], strides = [1, 1]} : vector<6x128xf32> to vector<2x128xf32>
    %109 = arith.truncf %108 : vector<2x128xf32> to vector<2x128xbf16>
    %cst_33 = arith.constant dense<0.000000e+00> : vector<2x128xf32>
    %110 = tpu.matmul %109, %5, %cst_33 {dimension_numbers = #tpu.dot_dimension_numbers<[1], [0], [0], [1], [0, 0, 1, 1], [], []>} : vector<2x128xbf16>, vector<128x128xbf16>, vector<2x128xf32> -> vector<2x128xf32>
    %111 = arith.addf %107, %110 : vector<2x128xf32>
    %112 = vector.extract_strided_slice %104 {offsets = [4, 0], sizes = [2, 128], strides = [1, 1]} : vector<6x128xf32> to vector<2x128xf32>
    %113 = arith.truncf %112 : vector<2x128xf32> to vector<2x128xbf16>
    %cst_34 = arith.constant dense<0.000000e+00> : vector<2x128xf32>
    %114 = tpu.matmul %113, %7, %cst_34 {dimension_numbers = #tpu.dot_dimension_numbers<[1], [0], [0], [1], [0, 0, 1, 1], [], []>} : vector<2x128xbf16>, vector<128x128xbf16>, vector<2x128xf32> -> vector<2x128xf32>
    %115 = arith.addf %111, %114 : vector<2x128xf32>
    %116 = vector.broadcast %8 : vector<1x128xf32> to vector<2x128xf32>
    %117 = arith.addf %115, %116 : vector<2x128xf32>
    %cst_35 = arith.constant 0.000000e+00 : f32
    %118 = vector.broadcast %cst_35 : f32 to vector<2x128xf32>
    %119 = arith.maximumf %117, %118 : vector<2x128xf32>
    %120 = tpu.concatenate %9, %119, %9 in 0 : vector<2x128xf32>, vector<2x128xf32>, vector<2x128xf32> -> vector<6x128xf32>
    %121 = vector.extract_strided_slice %120 {offsets = [0, 0], sizes = [2, 128], strides = [1, 1]} : vector<6x128xf32> to vector<2x128xf32>
    %122 = arith.truncf %121 : vector<2x128xf32> to vector<2x128xbf16>
    %cst_36 = arith.constant dense<0.000000e+00> : vector<2x128xf32>
    %123 = tpu.matmul %122, %3, %cst_36 {dimension_numbers = #tpu.dot_dimension_numbers<[1], [0], [0], [1], [0, 0, 1, 1], [], []>} : vector<2x128xbf16>, vector<128x128xbf16>, vector<2x128xf32> -> vector<2x128xf32>
    %124 = vector.extract_strided_slice %120 {offsets = [2, 0], sizes = [2, 128], strides = [1, 1]} : vector<6x128xf32> to vector<2x128xf32>
    %125 = arith.truncf %124 : vector<2x128xf32> to vector<2x128xbf16>
    %cst_37 = arith.constant dense<0.000000e+00> : vector<2x128xf32>
    %126 = tpu.matmul %125, %5, %cst_37 {dimension_numbers = #tpu.dot_dimension_numbers<[1], [0], [0], [1], [0, 0, 1, 1], [], []>} : vector<2x128xbf16>, vector<128x128xbf16>, vector<2x128xf32> -> vector<2x128xf32>
    %127 = arith.addf %123, %126 : vector<2x128xf32>
    %128 = vector.extract_strided_slice %120 {offsets = [4, 0], sizes = [2, 128], strides = [1, 1]} : vector<6x128xf32> to vector<2x128xf32>
    %129 = arith.truncf %128 : vector<2x128xf32> to vector<2x128xbf16>
    %cst_38 = arith.constant dense<0.000000e+00> : vector<2x128xf32>
    %130 = tpu.matmul %129, %7, %cst_38 {dimension_numbers = #tpu.dot_dimension_numbers<[1], [0], [0], [1], [0, 0, 1, 1], [], []>} : vector<2x128xbf16>, vector<128x128xbf16>, vector<2x128xf32> -> vector<2x128xf32>
    %131 = arith.addf %127, %130 : vector<2x128xf32>
    %132 = vector.broadcast %8 : vector<1x128xf32> to vector<2x128xf32>
    %133 = arith.addf %131, %132 : vector<2x128xf32>
    %134 = arith.addf %133, %101 : vector<2x128xf32>
    %135 = arith.truncf %134 : vector<2x128xf32> to vector<2x128xbf16>
    %c0_39 = arith.constant 0 : index
    %c0_40 = arith.constant 0 : index
    %136 = vector.load %arg5[%c0_39, %c0_40] : memref<128x128xbf16, #tpu.memory_space<vmem>>, vector<128x128xbf16>
    %cst_41 = arith.constant dense<0.000000e+00> : vector<2x128xf32>
    %137 = tpu.matmul %135, %136, %cst_41 {dimension_numbers = #tpu.dot_dimension_numbers<[1], [0], [0], [1], [0, 0, 1, 1], [], []>} : vector<2x128xbf16>, vector<128x128xbf16>, vector<2x128xf32> -> vector<2x128xf32>
    %c0_42 = arith.constant 0 : index
    %c0_43 = arith.constant 0 : index
    %138 = vector.load %arg6[%c0_42, %c0_43] : memref<1x128xf32, #tpu.memory_space<vmem>>, vector<1x128xf32>
    %139 = vector.broadcast %138 : vector<1x128xf32> to vector<2x128xf32>
    %140 = arith.addf %137, %139 : vector<2x128xf32>
    %c0_44 = arith.constant 0 : index
    %c0_45 = arith.constant 0 : index
    %141 = vector.load %arg7[%c0_44, %c0_45] : memref<2x128xf32, #tpu.memory_space<vmem>>, vector<2x128xf32>
    tpu.vector_store %arg7[%c0_44, %c0_45], %140 {strides = array<i32>} : memref<2x128xf32, #tpu.memory_space<vmem>>, vector<2x128xf32>,
    return
  }
}

</mosaic_0001>

<llo_original>
// kernel: tpu_custom_call.1
$region0: #{tpu_custom_call.1}
  #allocation0 [shape = 'u32[]', space=smem, size = 0x4, offset = 0x4, fixed_abs, tag = 'smem constant byte address 0x4 - core index']
  #allocation1 [shape = 'u32[144,128]{1,0:T(1,128)}', space=vmem, size = 0x12000, scoped, tag = 'internal scratch']
  %s0 = inlined_call_operand.hbm [shape: bf16[12,96], index: 0, kind: input, shape index: {}]
  %s1 = inlined_call_operand.hbm [shape: bf16[96,128], index: 1, kind: input, shape index: {}]
  %s2 = inlined_call_operand.vmem [shape: f32[1,128], index: 2, kind: input, shape index: {}]
  %s3 = inlined_call_operand.hbm [shape: bf16[3,128,128], index: 3, kind: input, shape index: {}]
  %s4 = inlined_call_operand.vmem [shape: f32[1,128], index: 4, kind: input, shape index: {}]
  %s5 = inlined_call_operand.hbm [shape: bf16[128,128], index: 5, kind: input, shape index: {}]
  %s6 = inlined_call_operand.vmem [shape: f32[1,128], index: 6, kind: input, shape index: {}]
  %s7 = inlined_call_operand.hbm [shape: f32[2,128], index: 7, kind: output, shape index: {}]
  %s8 = sld [smem:[#allocation0]]
  $region54: #{tpu_custom_call.1} parent=0
    _
  %s10 = ssub.s32 1, %s8
  %s11 = scalar_select 0, %s10, %s8
  $region1: #{tpu_custom_call.1} parent=0
    #allocation2 [shape = 'u8[4096]{0}', space=vmem, size = 0x1000, scoped, tag = 'input window, operand 0, single buffered']
    #allocation3 [shape = 's32[1]{0}', space=sflag, size = 0x4, scoped, tag = 'scoped memory for tpu_custom_call.1']
    #allocation4 [shape = 's32[1]{0}', space=sflag, size = 0x4, scoped, tag = 'scoped memory for tpu_custom_call.1']
    #allocation5 [shape = 'u8[24576]{0}', space=vmem, size = 0x6000, scoped, tag = 'input window, operand 1, single buffered']
    #allocation6 [shape = 's32[1]{0}', space=sflag, size = 0x4, scoped, tag = 'scoped memory for tpu_custom_call.1']
    #allocation7 [shape = 'u8[98304]{0}', space=vmem, size = 0x18000, scoped, tag = 'input window, operand 3, single buffered']
    #allocation8 [shape = 'u8[32768]{0}', space=vmem, size = 0x8000, scoped, tag = 'input window, operand 5, single buffered']
    #allocation9 [shape = 's32[1]{0}', space=sflag, size = 0x4, scoped, tag = 'scoped memory for tpu_custom_call.1']
    #allocation10 [shape = 'u8[1024]{0}', space=vmem, size = 0x400, scoped, tag = 'output window, operand 0, single buffered']
    %12 = vsyncpa [#allocation3], 0
    %13 = vsyncpa [#allocation6], 0
    %14 = vsyncpa [#allocation9], 0
    %15 = vsyncpa [#allocation4], 0
    // Predicated region
    $region2: #{tpu_custom_call.1} parent=1 // pred_check
      _
    $region3: #{tpu_custom_call.1} parent=1 // pred_check_branch
      %17 = sbr.rel (0) target = $region5
    $region4: #{tpu_custom_call.1} parent=1 // pred_region
      %s19 = ssub.s32 128, 128
      %20 = vsyncadd [#allocation3], %s19
      %s21 = sshll.u32 [#allocation2], 4
      %s22 = int_to_ptr.vmem [resolvable:$true] %s21
      %27 = dma.hbm_to_vmem [thread:$0]  %s0, 128, %s22, [#allocation3], 64, 64, 4
    $region5: #{tpu_custom_call.1} parent=1 // pred_fallthru
      _
    // Predicated region
    $region6: #{tpu_custom_call.1} parent=1 // pred_check
      _
    $region7: #{tpu_custom_call.1} parent=1 // pred_check_branch
      %29 = sbr.rel (0) target = $region9
    $region8: #{tpu_custom_call.1} parent=1 // pred_region
      %s31 = ssub.s32 768, 768
      %32 = vsyncadd [#allocation6], %s31
      %s33 = sshll.u32 [#allocation5], 4
      %s34 = int_to_ptr.vmem [resolvable:$true] %s33
      %39 = dma.hbm_to_vmem [thread:$0]  %s1, 768, %s34, [#allocation6], 64, 64, 4
    $region9: #{tpu_custom_call.1} parent=1 // pred_fallthru
      _
    // Predicated region
    $region10: #{tpu_custom_call.1} parent=1 // pred_check
      _
    $region11: #{tpu_custom_call.1} parent=1 // pred_check_branch
      %41 = sbr.rel (0) target = $region13
    $region12: #{tpu_custom_call.1} parent=1 // pred_region
      _
    $region13: #{tpu_custom_call.1} parent=1 // pred_fallthru
      _
    // Predicated region
    $region14: #{tpu_custom_call.1} parent=1 // pred_check
      _
    $region15: #{tpu_custom_call.1} parent=1 // pred_check_branch
      %43 = sbr.rel (0) target = $region17
    $region16: #{tpu_custom_call.1} parent=1 // pred_region
      %s45 = ssub.s32 3072, 3072
      %46 = vsyncadd [#allocation6], %s45
      %s47 = sshll.u32 [#allocation7], 4
      %s48 = int_to_ptr.vmem [resolvable:$true] %s47
      %53 = dma.hbm_to_vmem [thread:$0]  %s3, 3072, %s48, [#allocation6], 64, 64, 4
    $region17: #{tpu_custom_call.1} parent=1 // pred_fallthru
      _
    // Predicated region
    $region18: #{tpu_custom_call.1} parent=1 // pred_check
      _
    $region19: #{tpu_custom_call.1} parent=1 // pred_check_branch
      %55 = sbr.rel (0) target = $region21
    $region20: #{tpu_custom_call.1} parent=1 // pred_region
      _
    $region21: #{tpu_custom_call.1} parent=1 // pred_fallthru
      _
    // Predicated region
    $region22: #{tpu_custom_call.1} parent=1 // pred_check
      _
    $region23: #{tpu_custom_call.1} parent=1 // pred_check_branch
      %57 = sbr.rel (0) target = $region25
    $region24: #{tpu_custom_call.1} parent=1 // pred_region
      %s59 = ssub.s32 1024, 1024
      %60 = vsyncadd [#allocation9], %s59
      %s61 = sshll.u32 [#allocation8], 4
      %s62 = int_to_ptr.vmem [resolvable:$true] %s61
      %67 = dma.hbm_to_vmem [thread:$0]  %s5, 1024, %s62, [#allocation9], 64, 64, 4
    $region25: #{tpu_custom_call.1} parent=1 // pred_fallthru
      _
    // Predicated region
    $region26: #{tpu_custom_call.1} parent=1 // pred_check
      _
    $region27: #{tpu_custom_call.1} parent=1 // pred_check_branch
      %69 = sbr.rel (0) target = $region29
    $region28: #{tpu_custom_call.1} parent=1 // pred_region
      _
    $region29: #{tpu_custom_call.1} parent=1 // pred_fallthru
      _
    // Predicated region
    $region30: #{tpu_custom_call.1} parent=1 // pred_check
      _
    $region31: #{tpu_custom_call.1} parent=1 // pred_check_branch
      %71 = sbr.rel (0) target = $region33
    $region32: #{tpu_custom_call.1} parent=1 // pred_region
      %72 = dma.done [#allocation3], 128
    $region33: #{tpu_custom_call.1} parent=1 // pred_fallthru
      _
    // Predicated region
    $region34: #{tpu_custom_call.1} parent=1 // pred_check
      _
    $region35: #{tpu_custom_call.1} parent=1 // pred_check_branch
      %74 = sbr.rel (0) target = $region37
    $region36: #{tpu_custom_call.1} parent=1 // pred_region
      %75 = dma.done [#allocation6], 768
    $region37: #{tpu_custom_call.1} parent=1 // pred_fallthru
      _
    // Predicated region
    $region38: #{tpu_custom_call.1} parent=1 // pred_check
      _
    $region39: #{tpu_custom_call.1} parent=1 // pred_check_branch
      %77 = sbr.rel (0) target = $region41
    $region40: #{tpu_custom_call.1} parent=1 // pred_region
      %78 = dma.done [#allocation6], 3072
    $region41: #{tpu_custom_call.1} parent=1 // pred_fallthru
      _
    // Predicated region
    $region42: #{tpu_custom_call.1} parent=1 // pred_check
      _
    $region43: #{tpu_custom_call.1} parent=1 // pred_check_branch
      %80 = sbr.rel (0) target = $region45
    $region44: #{tpu_custom_call.1} parent=1 // pred_region
      %81 = dma.done [#allocation9], 1024
    $region45: #{tpu_custom_call.1} parent=1 // pred_fallthru
      _
    %v83 = vld [vmem:[#allocation5] sm:$0xf]
    %v84 = vld [vmem:[#allocation5 + $0x4] sm:$0xf]
    %v85 = vld [vmem:[#allocation5 + $0x8] sm:$0xf]
    %v86 = vld [vmem:[#allocation5 + $0xc] sm:$0xf]
    %v87 = vld [vmem:[#allocation5 + $0x10] sm:$0xf]
    %v88 = vld [vmem:[#allocation5 + $0x14] sm:$0xf]
    %v89 = vld [vmem:[#allocation5 + $0x18] sm:$0xf]
    %v90 = vld [vmem:[#allocation5 + $0x1c] sm:$0xf]
    %v91 = vld [vmem:[#allocation5 + $0x20] sm:$0xf]
    %v92 = vld [vmem:[#allocation5 + $0x24] sm:$0xf]
    %v93 = vld [vmem:[#allocation5 + $0x28] sm:$0xf]
    %v94 = vld [vmem:[#allocation5 + $0x2c] sm:$0xf]
    %v95 = vld [vmem:[%s2] sm:$0x1]
    %v96 = vld [vmem:[#allocation7] sm:$0xf]
    %v97 = vld [vmem:[#allocation7 + $0x4] sm:$0xf]
    %v98 = vld [vmem:[#allocation7 + $0x8] sm:$0xf]
    %v99 = vld [vmem:[#allocation7 + $0xc] sm:$0xf]
    %v100 = vld [vmem:[#allocation7 + $0x10] sm:$0xf]
    %v101 = vld [vmem:[#allocation7 + $0x14] sm:$0xf]
    %v102 = vld [vmem:[#allocation7 + $0x18] sm:$0xf]
    %v103 = vld [vmem:[#allocation7 + $0x1c] sm:$0xf]
    %v104 = vld [vmem:[#allocation7 + $0x20] sm:$0xf]
    %v105 = vld [vmem:[#allocation7 + $0x24] sm:$0xf]
    %v106 = vld [vmem:[#allocation7 + $0x28] sm:$0xf]
    %v107 = vld [vmem:[#allocation7 + $0x2c] sm:$0xf]
    %v108 = vld [vmem:[#allocation7 + $0x30] sm:$0xf]
    %v109 = vld [vmem:[#allocation7 + $0x34] sm:$0xf]
    %v110 = vld [vmem:[#allocation7 + $0x38] sm:$0xf]
    %v111 = vld [vmem:[#allocation7 + $0x3c] sm:$0xf]
    %s112 = scalar_lea.vmem [#allocation7], 64
    %v113 = vld [vmem:[%s112] sm:$0xf]
    %v114 = vld [vmem:[%s112 + $0x4] sm:$0xf]
    %v115 = vld [vmem:[%s112 + $0x8] sm:$0xf]
    %v116 = vld [vmem:[%s112 + $0xc] sm:$0xf]
    %v117 = vld [vmem:[%s112 + $0x10] sm:$0xf]
    %v118 = vld [vmem:[%s112 + $0x14] sm:$0xf]
    %v119 = vld [vmem:[%s112 + $0x18] sm:$0xf]
    %v120 = vld [vmem:[%s112 + $0x1c] sm:$0xf]
    %v121 = vld [vmem:[%s112 + $0x20] sm:$0xf]
    %v122 = vld [vmem:[%s112 + $0x24] sm:$0xf]
    %v123 = vld [vmem:[%s112 + $0x28] sm:$0xf]
    %v124 = vld [vmem:[%s112 + $0x2c] sm:$0xf]
    %v125 = vld [vmem:[%s112 + $0x30] sm:$0xf]
    %v126 = vld [vmem:[%s112 + $0x34] sm:$0xf]
    %v127 = vld [vmem:[%s112 + $0x38] sm:$0xf]
    %v128 = vld [vmem:[%s112 + $0x3c] sm:$0xf]
    %s129 = scalar_lea.vmem [#allocation7], 128
    %v130 = vld [vmem:[%s129] sm:$0xf]
    %v131 = vld [vmem:[%s129 + $0x4] sm:$0xf]
    %v132 = vld [vmem:[%s129 + $0x8] sm:$0xf]
    %v133 = vld [vmem:[%s129 + $0xc] sm:$0xf]
    %v134 = vld [vmem:[%s129 + $0x10] sm:$0xf]
    %v135 = vld [vmem:[%s129 + $0x14] sm:$0xf]
    %v136 = vld [vmem:[%s129 + $0x18] sm:$0xf]
    %v137 = vld [vmem:[%s129 + $0x1c] sm:$0xf]
    %v138 = vld [vmem:[%s129 + $0x20] sm:$0xf]
    %v139 = vld [vmem:[%s129 + $0x24] sm:$0xf]
    %v140 = vld [vmem:[%s129 + $0x28] sm:$0xf]
    %v141 = vld [vmem:[%s129 + $0x2c] sm:$0xf]
    %v142 = vld [vmem:[%s129 + $0x30] sm:$0xf]
    %v143 = vld [vmem:[%s129 + $0x34] sm:$0xf]
    %v144 = vld [vmem:[%s129 + $0x38] sm:$0xf]
    %v145 = vld [vmem:[%s129 + $0x3c] sm:$0xf]
    %v146 = vld [vmem:[%s4] sm:$0x1]
    %v147 = vld [vmem:[#allocation2] sm:$0xf]
    %v148 = vld [vmem:[#allocation2 + $0x4] sm:$0x3]
    %v150 = vlaneseq
    %v151 = vshrl.u32 %v150, 7
    %v152 = vsub.s32 0, %v151
    %v153 = vrot.slane %v95, %v152
    %v157 = vunpack.c.l.b16 %v147
    %v158 = vunpack.c.l.b16 %v148
    %v159 = vpack.c.b16 %v158, %v157
    %v172 = vunpack.c.l.b16 %v83
    %v173 = vunpack.c.l.b16 %v84
    %v174 = vunpack.c.l.b16 %v85
    %v175 = vunpack.c.l.b16 %v86
    %v176 = vunpack.c.l.b16 %v87
    %v177 = vunpack.c.l.b16 %v88
    %v178 = vunpack.c.l.b16 %v89
    %v179 = vunpack.c.l.b16 %v90
    %v180 = vunpack.c.l.b16 %v91
    %v181 = vunpack.c.l.b16 %v92
    %v182 = vunpack.c.l.b16 %v93
    %v183 = vunpack.c.l.b16 %v94
    %v184 = vpack.c.b16 %v173, %v172
    %v185 = vpack.c.b16 %v175, %v174
    %v186 = vpack.c.b16 %v177, %v176
    %v187 = vpack.c.b16 %v179, %v178
    %v188 = vpack.c.b16 %v181, %v180
    %v189 = vpack.c.b16 %v183, %v182
    %vm196 = vcmask 785408
    %v198 = vsel %vm196, %v159, 0
    %200 = vmatprep.subr.bf16.mxu0 0
    %201 = vmatpush1.bf16.msra.mxu0 %v184
    %202 = vmatprep.subr.bf16.mxu0 0
    %203 = vmatpush1.bf16.msra.mxu0 %v185
    %204 = vmatprep.subr.bf16.mxu0 0
    %205 = vmatpush1.bf16.msra.mxu0 %v186
    %206 = vmatprep.subr.bf16.mxu0 0
    %207 = vmatpush1.bf16.msra.mxu0 %v187
    %208 = vmatprep.subr.bf16.mxu0 0
    %209 = vmatpush1.bf16.msra.mxu0 %v188
    %210 = vmatprep.subr.bf16.mxu0 0
    %211 = vmatpush1.bf16.msra.mxu0 %v189
    %212 = vmatprep.subr.bf16.mxu0 0
    %213 = vmatpush1.bf16.msra.mxu0 0
    %214 = vmatprep.subr.bf16.mxu0 0
    %215 = vmatpush1.bf16.msra.mxu0 0
    %216 = vmatprep.subr.bf16.mxu0 0
    %217 = vmatpush1.bf16.msra.mxu0 0
    %218 = vmatprep.subr.bf16.mxu0 0
    %219 = vmatpush1.bf16.msra.mxu0 0
    %220 = vmatprep.subr.bf16.mxu0 0
    %221 = vmatpush1.bf16.msra.mxu0 0
    %222 = vmatprep.subr.bf16.mxu0 0
    %223 = vmatpush1.bf16.msra.mxu0 0
    %224 = vmatprep.subr.bf16.mxu0 0
    %225 = vmatpush1.bf16.msra.mxu0 0
    %226 = vmatprep.subr.bf16.mxu0 0
    %227 = vmatpush1.bf16.msra.mxu0 0
    %228 = vmatprep.subr.bf16.mxu0 0
    %229 = vmatpush1.bf16.msra.mxu0 0
    %230 = vmatprep.subr.bf16.mxu0 0
    %231 = vmatpush1.bf16.msra.mxu0 0
    %232 = vmatprep.mubr.bf16.mxu0 0
    %233 = vmatmul.mubr.bf16.gmra.mrb[0].mxu0 %v198
    %v234 = vpop.f32.mrb[0].mxu0
    %v235 = vadd.f32 %v153, %v234
    %v236 = vpop.f32.mrb[0].mxu0
    %v237 = vpop.f32.mrb[0].mxu0
    %v238 = vadd.f32 %v153, %v237
    %v239 = vpop.f32.mrb[0].mxu0
    %240 = vdwg.mxu0
    %v241 = vmax.f32 %v235, 0.0
    %v242 = vmax.f32 %v238, 0.0
    %vm245 = vcmask 1041408
    %v246 = vrot.slane %v241, 6
    %v247 = vrot.slane %v242, 6
    %v248 = vsel %vm245, %v246, %v247
    %v251 = vsel %vm245, 0.0, %v246
    %vm252 = vcmask 1045504
    %v253 = vsel %vm252, %v248, 0.0
    %v254 = vpack.c.bf16 %v253, %v251
    %v256 = vrot.slane %v254, 1
    %v274 = vunpack.c.l.b16 %v113
    %v275 = vunpack.c.l.b16 %v114
    %v276 = vunpack.c.l.b16 %v115
    %v277 = vunpack.c.l.b16 %v116
    %v278 = vunpack.c.l.b16 %v117
    %v279 = vunpack.c.l.b16 %v118
    %v280 = vunpack.c.l.b16 %v119
    %v281 = vunpack.c.l.b16 %v120
    %v282 = vunpack.c.l.b16 %v121
    %v283 = vunpack.c.l.b16 %v122
    %v284 = vunpack.c.l.b16 %v123
    %v285 = vunpack.c.l.b16 %v124
    %v286 = vunpack.c.l.b16 %v125
    %v287 = vunpack.c.l.b16 %v126
    %v288 = vunpack.c.l.b16 %v127
    %v289 = vunpack.c.l.b16 %v128
    %v290 = vpack.c.b16 %v275, %v274
    %v291 = vpack.c.b16 %v277, %v276
    %v292 = vpack.c.b16 %v279, %v278
    %v293 = vpack.c.b16 %v281, %v280
    %v294 = vpack.c.b16 %v283, %v282
    %v295 = vpack.c.b16 %v285, %v284
    %v296 = vpack.c.b16 %v287, %v286
    %v297 = vpack.c.b16 %v289, %v288
    %306 = vmatprep.subr.bf16.mxu0 0
    %307 = vmatpush1.bf16.msra.mxu0 %v290
    %308 = vmatprep.subr.bf16.mxu0 0
    %309 = vmatpush1.bf16.msra.mxu0 %v291
    %310 = vmatprep.subr.bf16.mxu0 0
    %311 = vmatpush1.bf16.msra.mxu0 %v292
    %312 = vmatprep.subr.bf16.mxu0 0
    %313 = vmatpush1.bf16.msra.mxu0 %v293
    %314 = vmatprep.subr.bf16.mxu0 0
    %315 = vmatpush1.bf16.msra.mxu0 %v294
    %316 = vmatprep.subr.bf16.mxu0 0
    %317 = vmatpush1.bf16.msra.mxu0 %v295
    %318 = vmatprep.subr.bf16.mxu0 0
    %319 = vmatpush1.bf16.msra.mxu0 %v296
    %320 = vmatprep.subr.bf16.mxu0 0
    %321 = vmatpush1.bf16.msra.mxu0 %v297
    %322 = vmatprep.subr.bf16.mxu0 0
    %323 = vmatpush1.bf16.msra.mxu0 0
    %324 = vmatprep.subr.bf16.mxu0 0
    %325 = vmatpush1.bf16.msra.mxu0 0
    %326 = vmatprep.subr.bf16.mxu0 0
    %327 = vmatpush1.bf16.msra.mxu0 0
    %328 = vmatprep.subr.bf16.mxu0 0
    %329 = vmatpush1.bf16.msra.mxu0 0
    %330 = vmatprep.subr.bf16.mxu0 0
    %331 = vmatpush1.bf16.msra.mxu0 0
    %332 = vmatprep.subr.bf16.mxu0 0
    %333 = vmatpush1.bf16.msra.mxu0 0
    %334 = vmatprep.subr.bf16.mxu0 0
    %335 = vmatpush1.bf16.msra.mxu0 0
    %336 = vmatprep.subr.bf16.mxu0 0
    %337 = vmatpush1.bf16.msra.mxu0 0
    %338 = vmatprep.mubr.bf16.mxu0 0
    %339 = vmatmul.mubr.bf16.gmra.mrb[0].mxu0 %v256
    %v340 = vpop.f32.mrb[0].mxu0
    %v341 = vadd.f32 0.0, %v340
    %v342 = vpop.f32.mrb[0].mxu0
    %v343 = vpop.f32.mrb[0].mxu0
    %v344 = vadd.f32 0.0, %v343
    %v345 = vpop.f32.mrb[0].mxu0
    %346 = vdwg.mxu0
    %v363 = vunpack.c.l.b16 %v96
    %v364 = vunpack.c.l.b16 %v97
    %v365 = vunpack.c.l.b16 %v98
    %v366 = vunpack.c.l.b16 %v99
    %v367 = vunpack.c.l.b16 %v100
    %v368 = vunpack.c.l.b16 %v101
    %v369 = vunpack.c.l.b16 %v102
    %v370 = vunpack.c.l.b16 %v103
    %v371 = vunpack.c.l.b16 %v104
    %v372 = vunpack.c.l.b16 %v105
    %v373 = vunpack.c.l.b16 %v106
    %v374 = vunpack.c.l.b16 %v107
    %v375 = vunpack.c.l.b16 %v108
    %v376 = vunpack.c.l.b16 %v109
    %v377 = vunpack.c.l.b16 %v110
    %v378 = vunpack.c.l.b16 %v111
    %v379 = vpack.c.b16 %v364, %v363
    %v380 = vpack.c.b16 %v366, %v365
    %v381 = vpack.c.b16 %v368, %v367
    %v382 = vpack.c.b16 %v370, %v369
    %v383 = vpack.c.b16 %v372, %v371
    %v384 = vpack.c.b16 %v374, %v373
    %v385 = vpack.c.b16 %v376, %v375
    %v386 = vpack.c.b16 %v378, %v377
    %395 = vmatprep.subr.bf16.mxu0 0
    %396 = vmatpush1.bf16.msra.mxu0 %v379
    %397 = vmatprep.subr.bf16.mxu0 0
    %398 = vmatpush1.bf16.msra.mxu0 %v380
    %399 = vmatprep.subr.bf16.mxu0 0
    %400 = vmatpush1.bf16.msra.mxu0 %v381
    %401 = vmatprep.subr.bf16.mxu0 0
    %402 = vmatpush1.bf16.msra.mxu0 %v382
    %403 = vmatprep.subr.bf16.mxu0 0
    %404 = vmatpush1.bf16.msra.mxu0 %v383
    %405 = vmatprep.subr.bf16.mxu0 0
    %406 = vmatpush1.bf16.msra.mxu0 %v384
    %407 = vmatprep.subr.bf16.mxu0 0
    %408 = vmatpush1.bf16.msra.mxu0 %v385
    %409 = vmatprep.subr.bf16.mxu0 0
    %410 = vmatpush1.bf16.msra.mxu0 %v386
    %411 = vmatprep.subr.bf16.mxu0 0
    %412 = vmatpush1.bf16.msra.mxu0 0
    %413 = vmatprep.subr.bf16.mxu0 0
    %414 = vmatpush1.bf16.msra.mxu0 0
    %415 = vmatprep.subr.bf16.mxu0 0
    %416 = vmatpush1.bf16.msra.mxu0 0
    %417 = vmatprep.subr.bf16.mxu0 0
    %418 = vmatpush1.bf16.msra.mxu0 0
    %419 = vmatprep.subr.bf16.mxu0 0
    %420 = vmatpush1.bf16.msra.mxu0 0
    %421 = vmatprep.subr.bf16.mxu0 0
    %422 = vmatpush1.bf16.msra.mxu0 0
    %423 = vmatprep.subr.bf16.mxu0 0
    %424 = vmatpush1.bf16.msra.mxu0 0
    %425 = vmatprep.subr.bf16.mxu0 0
    %426 = vmatpush1.bf16.msra.mxu0 0
    %427 = vmatprep.mubr.bf16.mxu0 0
    %428 = vmatmul.mubr.bf16.gmra.mrb[0].mxu0 %v254
    %v429 = vpop.f32.mrb[0].mxu0
    %v430 = vadd.f32 %v341, %v429
    %v431 = vpop.f32.mrb[0].mxu0
    %v432 = vpop.f32.mrb[0].mxu0
    %v433 = vadd.f32 %v344, %v432
    %v434 = vpop.f32.mrb[0].mxu0
    %435 = vdwg.mxu0
    %v436 = vrot.slane %v254, 2
    %v454 = vunpack.c.l.b16 %v130
    %v455 = vunpack.c.l.b16 %v131
    %v456 = vunpack.c.l.b16 %v132
    %v457 = vunpack.c.l.b16 %v133
    %v458 = vunpack.c.l.b16 %v134
    %v459 = vunpack.c.l.b16 %v135
    %v460 = vunpack.c.l.b16 %v136
    %v461 = vunpack.c.l.b16 %v137
    %v462 = vunpack.c.l.b16 %v138
    %v463 = vunpack.c.l.b16 %v139
    %v464 = vunpack.c.l.b16 %v140
    %v465 = vunpack.c.l.b16 %v141
    %v466 = vunpack.c.l.b16 %v142
    %v467 = vunpack.c.l.b16 %v143
    %v468 = vunpack.c.l.b16 %v144
    %v469 = vunpack.c.l.b16 %v145
    %v470 = vpack.c.b16 %v455, %v454
    %v471 = vpack.c.b16 %v457, %v456
    %v472 = vpack.c.b16 %v459, %v458
    %v473 = vpack.c.b16 %v461, %v460
    %v474 = vpack.c.b16 %v463, %v462
    %v475 = vpack.c.b16 %v465, %v464
    %v476 = vpack.c.b16 %v467, %v466
    %v477 = vpack.c.b16 %v469, %v468
    %486 = vmatprep.subr.bf16.mxu0 0
    %487 = vmatpush1.bf16.msra.mxu0 %v470
    %488 = vmatprep.subr.bf16.mxu0 0
    %489 = vmatpush1.bf16.msra.mxu0 %v471
    %490 = vmatprep.subr.bf16.mxu0 0
    %491 = vmatpush1.bf16.msra.mxu0 %v472
    %492 = vmatprep.subr.bf16.mxu0 0
    %493 = vmatpush1.bf16.msra.mxu0 %v473
    %494 = vmatprep.subr.bf16.mxu0 0
    %495 = vmatpush1.bf16.msra.mxu0 %v474
    %496 = vmatprep.subr.bf16.mxu0 0
    %497 = vmatpush1.bf16.msra.mxu0 %v475
    %498 = vmatprep.subr.bf16.mxu0 0
    %499 = vmatpush1.bf16.msra.mxu0 %v476
    %500 = vmatprep.subr.bf16.mxu0 0
    %501 = vmatpush1.bf16.msra.mxu0 %v477
    %502 = vmatprep.subr.bf16.mxu0 0
    %503 = vmatpush1.bf16.msra.mxu0 0
    %504 = vmatprep.subr.bf16.mxu0 0
    %505 = vmatpush1.bf16.msra.mxu0 0
    %506 = vmatprep.subr.bf16.mxu0 0
    %507 = vmatpush1.bf16.msra.mxu0 0
    %508 = vmatprep.subr.bf16.mxu0 0
    %509 = vmatpush1.bf16.msra.mxu0 0
    %510 = vmatprep.subr.bf16.mxu0 0
    %511 = vmatpush1.bf16.msra.mxu0 0
    %512 = vmatprep.subr.bf16.mxu0 0
    %513 = vmatpush1.bf16.msra.mxu0 0
    %514 = vmatprep.subr.bf16.mxu0 0
    %515 = vmatpush1.bf16.msra.mxu0 0
    %516 = vmatprep.subr.bf16.mxu0 0
    %517 = vmatpush1.bf16.msra.mxu0 0
    %518 = vmatprep.mubr.bf16.mxu0 0
    %519 = vmatmul.mubr.bf16.gmra.mrb[0].mxu0 %v436
    %v520 = vpop.f32.mrb[0].mxu0
    %v521 = vadd.f32 0.0, %v520
    %v522 = vpop.f32.mrb[0].mxu0
    %v523 = vpop.f32.mrb[0].mxu0
    %v524 = vadd.f32 0.0, %v523
    %v525 = vpop.f32.mrb[0].mxu0
    %526 = vdwg.mxu0
    %v527 = vadd.f32 %v430, %v521
    %v528 = vadd.f32 %v433, %v524
    %v530 = vlaneseq
    %v531 = vshrl.u32 %v530, 7
    %v532 = vsub.s32 0, %v531
    %v533 = vrot.slane %v146, %v532
    %v535 = vadd.f32 %v527, %v533
    %v536 = vadd.f32 %v528, %v533
    %v537 = vmax.f32 %v535, 0.0
    %v538 = vmax.f32 %v536, 0.0
    %v541 = vrot.slane %v537, 6
    %v542 = vrot.slane %v538, 6
    %v543 = vsel %vm245, %v541, %v542
    %v546 = vsel %vm245, 0.0, %v541
    %v547 = vsel %vm252, %v543, 0.0
    %v548 = vpack.c.bf16 %v547, %v546
    %v550 = vrot.slane %v548, 1
    %552 = vmatprep.subr.bf16.mxu0 0
    %553 = vmatpush1.bf16.msra.mxu0 %v290
    %554 = vmatprep.subr.bf16.mxu0 0
    %555 = vmatpush1.bf16.msra.mxu0 %v291
    %556 = vmatprep.subr.bf16.mxu0 0
    %557 = vmatpush1.bf16.msra.mxu0 %v292
    %558 = vmatprep.subr.bf16.mxu0 0
    %559 = vmatpush1.bf16.msra.mxu0 %v293
    %560 = vmatprep.subr.bf16.mxu0 0
    %561 = vmatpush1.bf16.msra.mxu0 %v294
    %562 = vmatprep.subr.bf16.mxu0 0
    %563 = vmatpush1.bf16.msra.mxu0 %v295
    %564 = vmatprep.subr.bf16.mxu0 0
    %565 = vmatpush1.bf16.msra.mxu0 %v296
    %566 = vmatprep.subr.bf16.mxu0 0
    %567 = vmatpush1.bf16.msra.mxu0 %v297
    %568 = vmatprep.subr.bf16.mxu0 0
    %569 = vmatpush1.bf16.msra.mxu0 0
    %570 = vmatprep.subr.bf16.mxu0 0
    %571 = vmatpush1.bf16.msra.mxu0 0
    %572 = vmatprep.subr.bf16.mxu0 0
    %573 = vmatpush1.bf16.msra.mxu0 0
    %574 = vmatprep.subr.bf16.mxu0 0
    %575 = vmatpush1.bf16.msra.mxu0 0
    %576 = vmatprep.subr.bf16.mxu0 0
    %577 = vmatpush1.bf16.msra.mxu0 0
    %578 = vmatprep.subr.bf16.mxu0 0
    %579 = vmatpush1.bf16.msra.mxu0 0
    %580 = vmatprep.subr.bf16.mxu0 0
    %581 = vmatpush1.bf16.msra.mxu0 0
    %582 = vmatprep.subr.bf16.mxu0 0
    %583 = vmatpush1.bf16.msra.mxu0 0
    %584 = vmatprep.mubr.bf16.mxu0 0
    %585 = vmatmul.mubr.bf16.gmra.mrb[0].mxu0 %v550
    %v586 = vpop.f32.mrb[0].mxu0
    %v587 = vadd.f32 0.0, %v586
    %v588 = vpop.f32.mrb[0].mxu0
    %v589 = vpop.f32.mrb[0].mxu0
    %v590 = vadd.f32 0.0, %v589
    %v591 = vpop.f32.mrb[0].mxu0
    %592 = vdwg.mxu0
    %593 = vmatprep.subr.bf16.mxu0 0
    %594 = vmatpush1.bf16.msra.mxu0 %v379
    %595 = vmatprep.subr.bf16.mxu0 0
    %596 = vmatpush1.bf16.msra.mxu0 %v380
    %597 = vmatprep.subr.bf16.mxu0 0
    %598 = vmatpush1.bf16.msra.mxu0 %v381
    %599 = vmatprep.subr.bf16.mxu0 0
    %600 = vmatpush1.bf16.msra.mxu0 %v382
    %601 = vmatprep.subr.bf16.mxu0 0
    %602 = vmatpush1.bf16.msra.mxu0 %v383
    %603 = vmatprep.subr.bf16.mxu0 0
    %604 = vmatpush1.bf16.msra.mxu0 %v384
    %605 = vmatprep.subr.bf16.mxu0 0
    %606 = vmatpush1.bf16.msra.mxu0 %v385
    %607 = vmatprep.subr.bf16.mxu0 0
    %608 = vmatpush1.bf16.msra.mxu0 %v386
    %609 = vmatprep.subr.bf16.mxu0 0
    %610 = vmatpush1.bf16.msra.mxu0 0
    %611 = vmatprep.subr.bf16.mxu0 0
    %612 = vmatpush1.bf16.msra.mxu0 0
    %613 = vmatprep.subr.bf16.mxu0 0
    %614 = vmatpush1.bf16.msra.mxu0 0
    %615 = vmatprep.subr.bf16.mxu0 0
    %616 = vmatpush1.bf16.msra.mxu0 0
    %617 = vmatprep.subr.bf16.mxu0 0
    %618 = vmatpush1.bf16.msra.mxu0 0
    %619 = vmatprep.subr.bf16.mxu0 0
    %620 = vmatpush1.bf16.msra.mxu0 0
    %621 = vmatprep.subr.bf16.mxu0 0
    %622 = vmatpush1.bf16.msra.mxu0 0
    %623 = vmatprep.subr.bf16.mxu0 0
    %624 = vmatpush1.bf16.msra.mxu0 0
    %625 = vmatprep.mubr.bf16.mxu0 0
    %626 = vmatmul.mubr.bf16.gmra.mrb[0].mxu0 %v548
    %v627 = vpop.f32.mrb[0].mxu0
    %v628 = vadd.f32 %v587, %v627
    %v629 = vpop.f32.mrb[0].mxu0
    %v630 = vpop.f32.mrb[0].mxu0
    %v631 = vadd.f32 %v590, %v630
    %v632 = vpop.f32.mrb[0].mxu0
    %633 = vdwg.mxu0
    %v634 = vrot.slane %v548, 2
    %636 = vmatprep.subr.bf16.mxu0 0
    %637 = vmatpush1.bf16.msra.mxu0 %v470
    %638 = vmatprep.subr.bf16.mxu0 0
    %639 = vmatpush1.bf16.msra.mxu0 %v471
    %640 = vmatprep.subr.bf16.mxu0 0
    %641 = vmatpush1.bf16.msra.mxu0 %v472
    %642 = vmatprep.subr.bf16.mxu0 0
    %643 = vmatpush1.bf16.msra.mxu0 %v473
    %644 = vmatprep.subr.bf16.mxu0 0
    %645 = vmatpush1.bf16.msra.mxu0 %v474
    %646 = vmatprep.subr.bf16.mxu0 0
    %647 = vmatpush1.bf16.msra.mxu0 %v475
    %648 = vmatprep.subr.bf16.mxu0 0
    %649 = vmatpush1.bf16.msra.mxu0 %v476
    %650 = vmatprep.subr.bf16.mxu0 0
    %651 = vmatpush1.bf16.msra.mxu0 %v477
    %652 = vmatprep.subr.bf16.mxu0 0
    %653 = vmatpush1.bf16.msra.mxu0 0
    %654 = vmatprep.subr.bf16.mxu0 0
    %655 = vmatpush1.bf16.msra.mxu0 0
    %656 = vmatprep.subr.bf16.mxu0 0
    %657 = vmatpush1.bf16.msra.mxu0 0
    %658 = vmatprep.subr.bf16.mxu0 0
    %659 = vmatpush1.bf16.msra.mxu0 0
    %660 = vmatprep.subr.bf16.mxu0 0
    %661 = vmatpush1.bf16.msra.mxu0 0
    %662 = vmatprep.subr.bf16.mxu0 0
    %663 = vmatpush1.bf16.msra.mxu0 0
    %664 = vmatprep.subr.bf16.mxu0 0
    %665 = vmatpush1.bf16.msra.mxu0 0
    %666 = vmatprep.subr.bf16.mxu0 0
    %667 = vmatpush1.bf16.msra.mxu0 0
    %668 = vmatprep.mubr.bf16.mxu0 0
    %669 = vmatmul.mubr.bf16.gmra.mrb[0].mxu0 %v634
    %v670 = vpop.f32.mrb[0].mxu0
    %v671 = vadd.f32 0.0, %v670
    %v672 = vpop.f32.mrb[0].mxu0
    %v673 = vpop.f32.mrb[0].mxu0
    %v674 = vadd.f32 0.0, %v673
    %v675 = vpop.f32.mrb[0].mxu0
    %676 = vdwg.mxu0
    %v677 = vadd.f32 %v628, %v671
    %v678 = vadd.f32 %v631, %v674
    %v679 = vadd.f32 %v677, %v533
    %v680 = vadd.f32 %v678, %v533
    %vm681 = vcmask 1043456
    %v682 = vsel %vm681, %v680, 0.0
    %v684 = vrot.slane %v679, 2
    %v686 = vmax.f32 %v679, %v684
    %v687 = vrot.slane %v679, 4
    %v689 = vmax.f32 %v686, %v687
    %v691 = vrot.slane %v682, 4
    %v693 = vmax.f32 %v686, %v691
    %v694 = vrot.slane %v682, 2
    %v696 = vmax.f32 %v682, %v694
    %v697 = vmax.f32 %v696, %v691
    %v699 = vrot.slane %v693, 2
    %v702 = vrot.slane %v697, 4
    %v704 = vsel %vm245, %v689, %v699
    %v705 = vsel %vm681, %v704, %v702
    %v706 = vmax.f32 %v705, 0.0
    %v708 = vrot.slane %v706, 6
    %v710 = vsel %vm245, 0.0, %v708
    %v711 = vpack.c.bf16 %v710, %v710
    %v713 = vrot.slane %v711, 1
    %715 = vmatprep.subr.bf16.mxu0 0
    %716 = vmatpush1.bf16.msra.mxu0 %v290
    %717 = vmatprep.subr.bf16.mxu0 0
    %718 = vmatpush1.bf16.msra.mxu0 %v291
    %719 = vmatprep.subr.bf16.mxu0 0
    %720 = vmatpush1.bf16.msra.mxu0 %v292
    %721 = vmatprep.subr.bf16.mxu0 0
    %722 = vmatpush1.bf16.msra.mxu0 %v293
    %723 = vmatprep.subr.bf16.mxu0 0
    %724 = vmatpush1.bf16.msra.mxu0 %v294
    %725 = vmatprep.subr.bf16.mxu0 0
    %726 = vmatpush1.bf16.msra.mxu0 %v295
    %727 = vmatprep.subr.bf16.mxu0 0
    %728 = vmatpush1.bf16.msra.mxu0 %v296
    %729 = vmatprep.subr.bf16.mxu0 0
    %730 = vmatpush1.bf16.msra.mxu0 %v297
    %731 = vmatprep.subr.bf16.mxu0 0
    %732 = vmatpush1.bf16.msra.mxu0 0
    %733 = vmatprep.subr.bf16.mxu0 0
    %734 = vmatpush1.bf16.msra.mxu0 0
    %735 = vmatprep.subr.bf16.mxu0 0
    %736 = vmatpush1.bf16.msra.mxu0 0
    %737 = vmatprep.subr.bf16.mxu0 0
    %738 = vmatpush1.bf16.msra.mxu0 0
    %739 = vmatprep.subr.bf16.mxu0 0
    %740 = vmatpush1.bf16.msra.mxu0 0
    %741 = vmatprep.subr.bf16.mxu0 0
    %742 = vmatpush1.bf16.msra.mxu0 0
    %743 = vmatprep.subr.bf16.mxu0 0
    %744 = vmatpush1.bf16.msra.mxu0 0
    %745 = vmatprep.subr.bf16.mxu0 0
    %746 = vmatpush1.bf16.msra.mxu0 0
    %747 = vmatprep.mubr.bf16.mxu0 0
    %748 = vmatmul.mubr.bf16.gmra.mrb[0].mxu0 %v713
    %v749 = vpop.f32.mrb[0].mxu0
    %v750 = vadd.f32 0.0, %v749
    %v751 = vpop.f32.mrb[0].mxu0
    %v752 = vpop.f32.mrb[0].mxu0
    %v753 = vpop.f32.mrb[0].mxu0
    %754 = vdwg.mxu0
    %755 = vmatprep.subr.bf16.mxu0 0
    %756 = vmatpush1.bf16.msra.mxu0 %v379
    %757 = vmatprep.subr.bf16.mxu0 0
    %758 = vmatpush1.bf16.msra.mxu0 %v380
    %759 = vmatprep.subr.bf16.mxu0 0
    %760 = vmatpush1.bf16.msra.mxu0 %v381
    %761 = vmatprep.subr.bf16.mxu0 0
    %762 = vmatpush1.bf16.msra.mxu0 %v382
    %763 = vmatprep.subr.bf16.mxu0 0
    %764 = vmatpush1.bf16.msra.mxu0 %v383
    %765 = vmatprep.subr.bf16.mxu0 0
    %766 = vmatpush1.bf16.msra.mxu0 %v384
    %767 = vmatprep.subr.bf16.mxu0 0
    %768 = vmatpush1.bf16.msra.mxu0 %v385
    %769 = vmatprep.subr.bf16.mxu0 0
    %770 = vmatpush1.bf16.msra.mxu0 %v386
    %771 = vmatprep.subr.bf16.mxu0 0
    %772 = vmatpush1.bf16.msra.mxu0 0
    %773 = vmatprep.subr.bf16.mxu0 0
    %774 = vmatpush1.bf16.msra.mxu0 0
    %775 = vmatprep.subr.bf16.mxu0 0
    %776 = vmatpush1.bf16.msra.mxu0 0
    %777 = vmatprep.subr.bf16.mxu0 0
    %778 = vmatpush1.bf16.msra.mxu0 0
    %779 = vmatprep.subr.bf16.mxu0 0
    %780 = vmatpush1.bf16.msra.mxu0 0
    %781 = vmatprep.subr.bf16.mxu0 0
    %782 = vmatpush1.bf16.msra.mxu0 0
    %783 = vmatprep.subr.bf16.mxu0 0
    %784 = vmatpush1.bf16.msra.mxu0 0
    %785 = vmatprep.subr.bf16.mxu0 0
    %786 = vmatpush1.bf16.msra.mxu0 0
    %787 = vmatprep.mubr.bf16.mxu0 0
    %788 = vmatmul.mubr.bf16.gmra.mrb[0].mxu0 %v711
    %v789 = vpop.f32.mrb[0].mxu0
    %v790 = vadd.f32 %v750, %v789
    %v791 = vpop.f32.mrb[0].mxu0
    %v792 = vpop.f32.mrb[0].mxu0
    %v793 = vpop.f32.mrb[0].mxu0
    %794 = vdwg.mxu0
    %v795 = vpack.c.bf16 0.0, %v710
    %v797 = vrot.slane %v795, 2
    %799 = vmatprep.subr.bf16.mxu0 0
    %800 = vmatpush1.bf16.msra.mxu0 %v470
    %801 = vmatprep.subr.bf16.mxu0 0
    %802 = vmatpush1.bf16.msra.mxu0 %v471
    %803 = vmatprep.subr.bf16.mxu0 0
    %804 = vmatpush1.bf16.msra.mxu0 %v472
    %805 = vmatprep.subr.bf16.mxu0 0
    %806 = vmatpush1.bf16.msra.mxu0 %v473
    %807 = vmatprep.subr.bf16.mxu0 0
    %808 = vmatpush1.bf16.msra.mxu0 %v474
    %809 = vmatprep.subr.bf16.mxu0 0
    %810 = vmatpush1.bf16.msra.mxu0 %v475
    %811 = vmatprep.subr.bf16.mxu0 0
    %812 = vmatpush1.bf16.msra.mxu0 %v476
    %813 = vmatprep.subr.bf16.mxu0 0
    %814 = vmatpush1.bf16.msra.mxu0 %v477
    %815 = vmatprep.subr.bf16.mxu0 0
    %816 = vmatpush1.bf16.msra.mxu0 0
    %817 = vmatprep.subr.bf16.mxu0 0
    %818 = vmatpush1.bf16.msra.mxu0 0
    %819 = vmatprep.subr.bf16.mxu0 0
    %820 = vmatpush1.bf16.msra.mxu0 0
    %821 = vmatprep.subr.bf16.mxu0 0
    %822 = vmatpush1.bf16.msra.mxu0 0
    %823 = vmatprep.subr.bf16.mxu0 0
    %824 = vmatpush1.bf16.msra.mxu0 0
    %825 = vmatprep.subr.bf16.mxu0 0
    %826 = vmatpush1.bf16.msra.mxu0 0
    %827 = vmatprep.subr.bf16.mxu0 0
    %828 = vmatpush1.bf16.msra.mxu0 0
    %829 = vmatprep.subr.bf16.mxu0 0
    %830 = vmatpush1.bf16.msra.mxu0 0
    %831 = vmatprep.mubr.bf16.mxu0 0
    %832 = vmatmul.mubr.bf16.gmra.mrb[0].mxu0 %v797
    %v833 = vpop.f32.mrb[0].mxu0
    %v834 = vadd.f32 0.0, %v833
    %v835 = vpop.f32.mrb[0].mxu0
    %v836 = vpop.f32.mrb[0].mxu0
    %v837 = vpop.f32.mrb[0].mxu0
    %838 = vdwg.mxu0
    %v839 = vadd.f32 %v790, %v834
    %v840 = vadd.f32 %v839, %v533
    %v841 = vmax.f32 %v840, 0.0
    %v843 = vrot.slane %v841, 6
    %v845 = vsel %vm245, 0.0, %v843
    %v846 = vpack.c.bf16 %v845, %v845
    %v848 = vrot.slane %v846, 1
    %850 = vmatprep.subr.bf16.mxu0 0
    %851 = vmatpush1.bf16.msra.mxu0 %v290
    %852 = vmatprep.subr.bf16.mxu0 0
    %853 = vmatpush1.bf16.msra.mxu0 %v291
    %854 = vmatprep.subr.bf16.mxu0 0
    %855 = vmatpush1.bf16.msra.mxu0 %v292
    %856 = vmatprep.subr.bf16.mxu0 0
    %857 = vmatpush1.bf16.msra.mxu0 %v293
    %858 = vmatprep.subr.bf16.mxu0 0
    %859 = vmatpush1.bf16.msra.mxu0 %v294
    %860 = vmatprep.subr.bf16.mxu0 0
    %861 = vmatpush1.bf16.msra.mxu0 %v295
    %862 = vmatprep.subr.bf16.mxu0 0
    %863 = vmatpush1.bf16.msra.mxu0 %v296
    %864 = vmatprep.subr.bf16.mxu0 0
    %865 = vmatpush1.bf16.msra.mxu0 %v297
    %866 = vmatprep.subr.bf16.mxu0 0
    %867 = vmatpush1.bf16.msra.mxu0 0
    %868 = vmatprep.subr.bf16.mxu0 0
    %869 = vmatpush1.bf16.msra.mxu0 0
    %870 = vmatprep.subr.bf16.mxu0 0
    %871 = vmatpush1.bf16.msra.mxu0 0
    %872 = vmatprep.subr.bf16.mxu0 0
    %873 = vmatpush1.bf16.msra.mxu0 0
    %874 = vmatprep.subr.bf16.mxu0 0
    %875 = vmatpush1.bf16.msra.mxu0 0
    %876 = vmatprep.subr.bf16.mxu0 0
    %877 = vmatpush1.bf16.msra.mxu0 0
    %878 = vmatprep.subr.bf16.mxu0 0
    %879 = vmatpush1.bf16.msra.mxu0 0
    %880 = vmatprep.subr.bf16.mxu0 0
    %881 = vmatpush1.bf16.msra.mxu0 0
    %882 = vmatprep.mubr.bf16.mxu0 0
    %883 = vmatmul.mubr.bf16.gmra.mrb[0].mxu0 %v848
    %v884 = vpop.f32.mrb[0].mxu0
    %v885 = vadd.f32 0.0, %v884
    %v886 = vpop.f32.mrb[0].mxu0
    %v887 = vpop.f32.mrb[0].mxu0
    %v888 = vpop.f32.mrb[0].mxu0
    %889 = vdwg.mxu0
    %890 = vmatprep.subr.bf16.mxu0 0
    %891 = vmatpush1.bf16.msra.mxu0 %v379
    %892 = vmatprep.subr.bf16.mxu0 0
    %893 = vmatpush1.bf16.msra.mxu0 %v380
    %894 = vmatprep.subr.bf16.mxu0 0
    %895 = vmatpush1.bf16.msra.mxu0 %v381
    %896 = vmatprep.subr.bf16.mxu0 0
    %897 = vmatpush1.bf16.msra.mxu0 %v382
    %898 = vmatprep.subr.bf16.mxu0 0
    %899 = vmatpush1.bf16.msra.mxu0 %v383
    %900 = vmatprep.subr.bf16.mxu0 0
    %901 = vmatpush1.bf16.msra.mxu0 %v384
    %902 = vmatprep.subr.bf16.mxu0 0
    %903 = vmatpush1.bf16.msra.mxu0 %v385
    %904 = vmatprep.subr.bf16.mxu0 0
    %905 = vmatpush1.bf16.msra.mxu0 %v386
    %906 = vmatprep.subr.bf16.mxu0 0
    %907 = vmatpush1.bf16.msra.mxu0 0
    %908 = vmatprep.subr.bf16.mxu0 0
    %909 = vmatpush1.bf16.msra.mxu0 0
    %910 = vmatprep.subr.bf16.mxu0 0
    %911 = vmatpush1.bf16.msra.mxu0 0
    %912 = vmatprep.subr.bf16.mxu0 0
    %913 = vmatpush1.bf16.msra.mxu0 0
    %914 = vmatprep.subr.bf16.mxu0 0
    %915 = vmatpush1.bf16.msra.mxu0 0
    %916 = vmatprep.subr.bf16.mxu0 0
    %917 = vmatpush1.bf16.msra.mxu0 0
    %918 = vmatprep.subr.bf16.mxu0 0
    %919 = vmatpush1.bf16.msra.mxu0 0
    %920 = vmatprep.subr.bf16.mxu0 0
    %921 = vmatpush1.bf16.msra.mxu0 0
    %922 = vmatprep.mubr.bf16.mxu0 0
    %923 = vmatmul.mubr.bf16.gmra.mrb[0].mxu0 %v846
    %v924 = vpop.f32.mrb[0].mxu0
    %v925 = vadd.f32 %v885, %v924
    %v926 = vpop.f32.mrb[0].mxu0
    %v927 = vpop.f32.mrb[0].mxu0
    %v928 = vpop.f32.mrb[0].mxu0
    %929 = vdwg.mxu0
    %v930 = vpack.c.bf16 0.0, %v845
    %v932 = vrot.slane %v930, 2
    %934 = vmatprep.subr.bf16.mxu0 0
    %935 = vmatpush1.bf16.msra.mxu0 %v470
    %936 = vmatprep.subr.bf16.mxu0 0
    %937 = vmatpush1.bf16.msra.mxu0 %v471
    %938 = vmatprep.subr.bf16.mxu0 0
    %939 = vmatpush1.bf16.msra.mxu0 %v472
    %940 = vmatprep.subr.bf16.mxu0 0
    %941 = vmatpush1.bf16.msra.mxu0 %v473
    %942 = vmatprep.subr.bf16.mxu0 0
    %943 = vmatpush1.bf16.msra.mxu0 %v474
    %944 = vmatprep.subr.bf16.mxu0 0
    %945 = vmatpush1.bf16.msra.mxu0 %v475
    %946 = vmatprep.subr.bf16.mxu0 0
    %947 = vmatpush1.bf16.msra.mxu0 %v476
    %948 = vmatprep.subr.bf16.mxu0 0
    %949 = vmatpush1.bf16.msra.mxu0 %v477
    %950 = vmatprep.subr.bf16.mxu0 0
    %951 = vmatpush1.bf16.msra.mxu0 0
    %952 = vmatprep.subr.bf16.mxu0 0
    %953 = vmatpush1.bf16.msra.mxu0 0
    %954 = vmatprep.subr.bf16.mxu0 0
    %955 = vmatpush1.bf16.msra.mxu0 0
    %956 = vmatprep.subr.bf16.mxu0 0
    %957 = vmatpush1.bf16.msra.mxu0 0
    %958 = vmatprep.subr.bf16.mxu0 0
    %959 = vmatpush1.bf16.msra.mxu0 0
    %960 = vmatprep.subr.bf16.mxu0 0
    %961 = vmatpush1.bf16.msra.mxu0 0
    %962 = vmatprep.subr.bf16.mxu0 0
    %963 = vmatpush1.bf16.msra.mxu0 0
    %964 = vmatprep.subr.bf16.mxu0 0
    %965 = vmatpush1.bf16.msra.mxu0 0
    %966 = vmatprep.mubr.bf16.mxu0 0
    %967 = vmatmul.mubr.bf16.gmra.mrb[0].mxu0 %v932
    %v968 = vpop.f32.mrb[0].mxu0
    %v969 = vadd.f32 0.0, %v968
    %v970 = vpop.f32.mrb[0].mxu0
    %v971 = vpop.f32.mrb[0].mxu0
    %v972 = vpop.f32.mrb[0].mxu0
    %973 = vdwg.mxu0
    %v974 = vadd.f32 %v925, %v969
    %v975 = vadd.f32 %v974, %v533
    %v976 = vadd.f32 %v975, %v705
    %v977 = vsel %vm252, %v976, 0.0
    %v979 = vrot.slane %v977, 2
    %v981 = vmax.f32 %v977, %v979
    %v982 = vrot.slane %v977, 4
    %v984 = vmax.f32 %v981, %v982
    %v985 = vmax.f32 %v984, 0.0
    %v987 = vrot.slane %v985, 6
    %v989 = vsel %vm245, 0.0, %v987
    %v990 = vsel %vm681, %v989, 0.0
    %v991 = vpack.c.bf16 %v990, %v990
    %v993 = vrot.slane %v991, 1
    %995 = vmatprep.subr.bf16.mxu0 0
    %996 = vmatpush1.bf16.msra.mxu0 %v290
    %997 = vmatprep.subr.bf16.mxu0 0
    %998 = vmatpush1.bf16.msra.mxu0 %v291
    %999 = vmatprep.subr.bf16.mxu0 0
    %1000 = vmatpush1.bf16.msra.mxu0 %v292
    %1001 = vmatprep.subr.bf16.mxu0 0
    %1002 = vmatpush1.bf16.msra.mxu0 %v293
    %1003 = vmatprep.subr.bf16.mxu0 0
    %1004 = vmatpush1.bf16.msra.mxu0 %v294
    %1005 = vmatprep.subr.bf16.mxu0 0
    %1006 = vmatpush1.bf16.msra.mxu0 %v295
    %1007 = vmatprep.subr.bf16.mxu0 0
    %1008 = vmatpush1.bf16.msra.mxu0 %v296
    %1009 = vmatprep.subr.bf16.mxu0 0
    %1010 = vmatpush1.bf16.msra.mxu0 %v297
    %1011 = vmatprep.subr.bf16.mxu0 0
    %1012 = vmatpush1.bf16.msra.mxu0 0
    %1013 = vmatprep.subr.bf16.mxu0 0
    %1014 = vmatpush1.bf16.msra.mxu0 0
    %1015 = vmatprep.subr.bf16.mxu0 0
    %1016 = vmatpush1.bf16.msra.mxu0 0
    %1017 = vmatprep.subr.bf16.mxu0 0
    %1018 = vmatpush1.bf16.msra.mxu0 0
    %1019 = vmatprep.subr.bf16.mxu0 0
    %1020 = vmatpush1.bf16.msra.mxu0 0
    %1021 = vmatprep.subr.bf16.mxu0 0
    %1022 = vmatpush1.bf16.msra.mxu0 0
    %1023 = vmatprep.subr.bf16.mxu0 0
    %1024 = vmatpush1.bf16.msra.mxu0 0
    %1025 = vmatprep.subr.bf16.mxu0 0
    %1026 = vmatpush1.bf16.msra.mxu0 0
    %1027 = vmatprep.mubr.bf16.mxu0 0
    %1028 = vmatmul.mubr.bf16.gmra.mrb[0].mxu0 %v993
    %v1029 = vpop.f32.mrb[0].mxu0
    %v1030 = vadd.f32 0.0, %v1029
    %v1031 = vpop.f32.mrb[0].mxu0
    %v1032 = vpop.f32.mrb[0].mxu0
    %v1033 = vpop.f32.mrb[0].mxu0
    %1034 = vdwg.mxu0
    %1035 = vmatprep.subr.bf16.mxu0 0
    %1036 = vmatpush1.bf16.msra.mxu0 %v379
    %1037 = vmatprep.subr.bf16.mxu0 0
    %1038 = vmatpush1.bf16.msra.mxu0 %v380
    %1039 = vmatprep.subr.bf16.mxu0 0
    %1040 = vmatpush1.bf16.msra.mxu0 %v381
    %1041 = vmatprep.subr.bf16.mxu0 0
    %1042 = vmatpush1.bf16.msra.mxu0 %v382
    %1043 = vmatprep.subr.bf16.mxu0 0
    %1044 = vmatpush1.bf16.msra.mxu0 %v383
    %1045 = vmatprep.subr.bf16.mxu0 0
    %1046 = vmatpush1.bf16.msra.mxu0 %v384
    %1047 = vmatprep.subr.bf16.mxu0 0
    %1048 = vmatpush1.bf16.msra.mxu0 %v385
    %1049 = vmatprep.subr.bf16.mxu0 0
    %1050 = vmatpush1.bf16.msra.mxu0 %v386
    %1051 = vmatprep.subr.bf16.mxu0 0
    %1052 = vmatpush1.bf16.msra.mxu0 0
    %1053 = vmatprep.subr.bf16.mxu0 0
    %1054 = vmatpush1.bf16.msra.mxu0 0
    %1055 = vmatprep.subr.bf16.mxu0 0
    %1056 = vmatpush1.bf16.msra.mxu0 0
    %1057 = vmatprep.subr.bf16.mxu0 0
    %1058 = vmatpush1.bf16.msra.mxu0 0
    %1059 = vmatprep.subr.bf16.mxu0 0
    %1060 = vmatpush1.bf16.msra.mxu0 0
    %1061 = vmatprep.subr.bf16.mxu0 0
    %1062 = vmatpush1.bf16.msra.mxu0 0
    %1063 = vmatprep.subr.bf16.mxu0 0
    %1064 = vmatpush1.bf16.msra.mxu0 0
    %1065 = vmatprep.subr.bf16.mxu0 0
    %1066 = vmatpush1.bf16.msra.mxu0 0
    %1067 = vmatprep.mubr.bf16.mxu0 0
    %1068 = vmatmul.mubr.bf16.gmra.mrb[0].mxu0 %v991
    %v1069 = vpop.f32.mrb[0].mxu0
    %v1070 = vadd.f32 %v1030, %v1069
    %v1071 = vpop.f32.mrb[0].mxu0
    %v1072 = vpop.f32.mrb[0].mxu0
    %v1073 = vpop.f32.mrb[0].mxu0
    %1074 = vdwg.mxu0
    %v1075 = vrot.slane %v991, 2
    %1077 = vmatprep.subr.bf16.mxu0 0
    %1078 = vmatpush1.bf16.msra.mxu0 %v470
    %1079 = vmatprep.subr.bf16.mxu0 0
    %1080 = vmatpush1.bf16.msra.mxu0 %v471
    %1081 = vmatprep.subr.bf16.mxu0 0
    %1082 = vmatpush1.bf16.msra.mxu0 %v472
    %1083 = vmatprep.subr.bf16.mxu0 0
    %1084 = vmatpush1.bf16.msra.mxu0 %v473
    %1085 = vmatprep.subr.bf16.mxu0 0
    %1086 = vmatpush1.bf16.msra.mxu0 %v474
    %1087 = vmatprep.subr.bf16.mxu0 0
    %1088 = vmatpush1.bf16.msra.mxu0 %v475
    %1089 = vmatprep.subr.bf16.mxu0 0
    %1090 = vmatpush1.bf16.msra.mxu0 %v476
    %1091 = vmatprep.subr.bf16.mxu0 0
    %1092 = vmatpush1.bf16.msra.mxu0 %v477
    %1093 = vmatprep.subr.bf16.mxu0 0
    %1094 = vmatpush1.bf16.msra.mxu0 0
    %1095 = vmatprep.subr.bf16.mxu0 0
    %1096 = vmatpush1.bf16.msra.mxu0 0
    %1097 = vmatprep.subr.bf16.mxu0 0
    %1098 = vmatpush1.bf16.msra.mxu0 0
    %1099 = vmatprep.subr.bf16.mxu0 0
    %1100 = vmatpush1.bf16.msra.mxu0 0
    %1101 = vmatprep.subr.bf16.mxu0 0
    %1102 = vmatpush1.bf16.msra.mxu0 0
    %1103 = vmatprep.subr.bf16.mxu0 0
    %1104 = vmatpush1.bf16.msra.mxu0 0
    %1105 = vmatprep.subr.bf16.mxu0 0
    %1106 = vmatpush1.bf16.msra.mxu0 0
    %1107 = vmatprep.subr.bf16.mxu0 0
    %1108 = vmatpush1.bf16.msra.mxu0 0
    %1109 = vmatprep.mubr.bf16.mxu0 0
    %1110 = vmatmul.mubr.bf16.gmra.mrb[0].mxu0 %v1075
    %v1111 = vpop.f32.mrb[0].mxu0
    %v1112 = vadd.f32 0.0, %v1111
    %v1113 = vpop.f32.mrb[0].mxu0
    %v1114 = vpop.f32.mrb[0].mxu0
    %v1115 = vpop.f32.mrb[0].mxu0
    %1116 = vdwg.mxu0
    %v1117 = vadd.f32 %v1070, %v1112
    %v1118 = vadd.f32 %v1117, %v533
    %v1119 = vmax.f32 %v1118, 0.0
    %v1121 = vrot.slane %v1119, 6
    %v1123 = vsel %vm245, 0.0, %v1121
    %v1124 = vsel %vm681, %v1123, 0.0
    %v1125 = vpack.c.bf16 %v1124, %v1124
    %v1127 = vrot.slane %v1125, 1
    %1129 = vmatprep.subr.bf16.mxu0 0
    %1130 = vmatpush1.bf16.msra.mxu0 %v290
    %1131 = vmatprep.subr.bf16.mxu0 0
    %1132 = vmatpush1.bf16.msra.mxu0 %v291
    %1133 = vmatprep.subr.bf16.mxu0 0
    %1134 = vmatpush1.bf16.msra.mxu0 %v292
    %1135 = vmatprep.subr.bf16.mxu0 0
    %1136 = vmatpush1.bf16.msra.mxu0 %v293
    %1137 = vmatprep.subr.bf16.mxu0 0
    %1138 = vmatpush1.bf16.msra.mxu0 %v294
    %1139 = vmatprep.subr.bf16.mxu0 0
    %1140 = vmatpush1.bf16.msra.mxu0 %v295
    %1141 = vmatprep.subr.bf16.mxu0 0
    %1142 = vmatpush1.bf16.msra.mxu0 %v296
    %1143 = vmatprep.subr.bf16.mxu0 0
    %1144 = vmatpush1.bf16.msra.mxu0 %v297
    %1145 = vmatprep.subr.bf16.mxu0 0
    %1146 = vmatpush1.bf16.msra.mxu0 0
    %1147 = vmatprep.subr.bf16.mxu0 0
    %1148 = vmatpush1.bf16.msra.mxu0 0
    %1149 = vmatprep.subr.bf16.mxu0 0
    %1150 = vmatpush1.bf16.msra.mxu0 0
    %1151 = vmatprep.subr.bf16.mxu0 0
    %1152 = vmatpush1.bf16.msra.mxu0 0
    %1153 = vmatprep.subr.bf16.mxu0 0
    %1154 = vmatpush1.bf16.msra.mxu0 0
    %1155 = vmatprep.subr.bf16.mxu0 0
    %1156 = vmatpush1.bf16.msra.mxu0 0
    %1157 = vmatprep.subr.bf16.mxu0 0
    %1158 = vmatpush1.bf16.msra.mxu0 0
    %1159 = vmatprep.subr.bf16.mxu0 0
    %1160 = vmatpush1.bf16.msra.mxu0 0
    %1161 = vmatprep.mubr.bf16.mxu0 0
    %1162 = vmatmul.mubr.bf16.gmra.mrb[0].mxu0 %v1127
    %v1163 = vpop.f32.mrb[0].mxu0
    %v1164 = vadd.f32 0.0, %v1163
    %v1165 = vpop.f32.mrb[0].mxu0
    %v1166 = vpop.f32.mrb[0].mxu0
    %v1167 = vpop.f32.mrb[0].mxu0
    %1168 = vdwg.mxu0
    %1169 = vmatprep.subr.bf16.mxu0 0
    %1170 = vmatpush1.bf16.msra.mxu0 %v379
    %1171 = vmatprep.subr.bf16.mxu0 0
    %1172 = vmatpush1.bf16.msra.mxu0 %v380
    %1173 = vmatprep.subr.bf16.mxu0 0
    %1174 = vmatpush1.bf16.msra.mxu0 %v381
    %1175 = vmatprep.subr.bf16.mxu0 0
    %1176 = vmatpush1.bf16.msra.mxu0 %v382
    %1177 = vmatprep.subr.bf16.mxu0 0
    %1178 = vmatpush1.bf16.msra.mxu0 %v383
    %1179 = vmatprep.subr.bf16.mxu0 0
    %1180 = vmatpush1.bf16.msra.mxu0 %v384
    %1181 = vmatprep.subr.bf16.mxu0 0
    %1182 = vmatpush1.bf16.msra.mxu0 %v385
    %1183 = vmatprep.subr.bf16.mxu0 0
    %1184 = vmatpush1.bf16.msra.mxu0 %v386
    %1185 = vmatprep.subr.bf16.mxu0 0
    %1186 = vmatpush1.bf16.msra.mxu0 0
    %1187 = vmatprep.subr.bf16.mxu0 0
    %1188 = vmatpush1.bf16.msra.mxu0 0
    %1189 = vmatprep.subr.bf16.mxu0 0
    %1190 = vmatpush1.bf16.msra.mxu0 0
    %1191 = vmatprep.subr.bf16.mxu0 0
    %1192 = vmatpush1.bf16.msra.mxu0 0
    %1193 = vmatprep.subr.bf16.mxu0 0
    %1194 = vmatpush1.bf16.msra.mxu0 0
    %1195 = vmatprep.subr.bf16.mxu0 0
    %1196 = vmatpush1.bf16.msra.mxu0 0
    %1197 = vmatprep.subr.bf16.mxu0 0
    %1198 = vmatpush1.bf16.msra.mxu0 0
    %1199 = vmatprep.subr.bf16.mxu0 0
    %1200 = vmatpush1.bf16.msra.mxu0 0
    %1201 = vmatprep.mubr.bf16.mxu0 0
    %1202 = vmatmul.mubr.bf16.gmra.mrb[0].mxu0 %v1125
    %v1203 = vpop.f32.mrb[0].mxu0
    %v1204 = vadd.f32 %v1164, %v1203
    %v1205 = vpop.f32.mrb[0].mxu0
    %v1206 = vpop.f32.mrb[0].mxu0
    %v1207 = vpop.f32.mrb[0].mxu0
    %1208 = vdwg.mxu0
    %v1209 = vrot.slane %v1125, 2
    %1211 = vmatprep.subr.bf16.mxu0 0
    %1212 = vmatpush1.bf16.msra.mxu0 %v470
    %1213 = vmatprep.subr.bf16.mxu0 0
    %1214 = vmatpush1.bf16.msra.mxu0 %v471
    %1215 = vmatprep.subr.bf16.mxu0 0
    %1216 = vmatpush1.bf16.msra.mxu0 %v472
    %1217 = vmatprep.subr.bf16.mxu0 0
    %1218 = vmatpush1.bf16.msra.mxu0 %v473
    %1219 = vmatprep.subr.bf16.mxu0 0
    %1220 = vmatpush1.bf16.msra.mxu0 %v474
    %1221 = vmatprep.subr.bf16.mxu0 0
    %1222 = vmatpush1.bf16.msra.mxu0 %v475
    %1223 = vmatprep.subr.bf16.mxu0 0
    %1224 = vmatpush1.bf16.msra.mxu0 %v476
    %1225 = vmatprep.subr.bf16.mxu0 0
    %1226 = vmatpush1.bf16.msra.mxu0 %v477
    %1227 = vmatprep.subr.bf16.mxu0 0
    %1228 = vmatpush1.bf16.msra.mxu0 0
    %1229 = vmatprep.subr.bf16.mxu0 0
    %1230 = vmatpush1.bf16.msra.mxu0 0
    %1231 = vmatprep.subr.bf16.mxu0 0
    %1232 = vmatpush1.bf16.msra.mxu0 0
    %1233 = vmatprep.subr.bf16.mxu0 0
    %1234 = vmatpush1.bf16.msra.mxu0 0
    %1235 = vmatprep.subr.bf16.mxu0 0
    %1236 = vmatpush1.bf16.msra.mxu0 0
    %1237 = vmatprep.subr.bf16.mxu0 0
    %1238 = vmatpush1.bf16.msra.mxu0 0
    %1239 = vmatprep.subr.bf16.mxu0 0
    %1240 = vmatpush1.bf16.msra.mxu0 0
    %1241 = vmatprep.subr.bf16.mxu0 0
    %1242 = vmatpush1.bf16.msra.mxu0 0
    %1243 = vmatprep.mubr.bf16.mxu0 0
    %1244 = vmatmul.mubr.bf16.gmra.mrb[0].mxu0 %v1209
    %v1245 = vpop.f32.mrb[0].mxu0
    %v1246 = vadd.f32 0.0, %v1245
    %v1247 = vpop.f32.mrb[0].mxu0
    %v1248 = vpop.f32.mrb[0].mxu0
    %v1249 = vpop.f32.mrb[0].mxu0
    %1250 = vdwg.mxu0
    %v1251 = vadd.f32 %v1204, %v1246
    %v1252 = vadd.f32 %v1251, %v533
    %v1253 = vadd.f32 %v1252, %v984
    %v1254 = vpack.c.bf16 %v1253, %v1253
    %v1255 = vld [vmem:[#allocation8] sm:$0xf]
    %v1256 = vld [vmem:[#allocation8 + $0x4] sm:$0xf]
    %v1257 = vld [vmem:[#allocation8 + $0x8] sm:$0xf]
    %v1258 = vld [vmem:[#allocation8 + $0xc] sm:$0xf]
    %v1259 = vld [vmem:[#allocation8 + $0x10] sm:$0xf]
    %v1260 = vld [vmem:[#allocation8 + $0x14] sm:$0xf]
    %v1261 = vld [vmem:[#allocation8 + $0x18] sm:$0xf]
    %v1262 = vld [vmem:[#allocation8 + $0x1c] sm:$0xf]
    %v1263 = vld [vmem:[#allocation8 + $0x20] sm:$0xf]
    %v1264 = vld [vmem:[#allocation8 + $0x24] sm:$0xf]
    %v1265 = vld [vmem:[#allocation8 + $0x28] sm:$0xf]
    %v1266 = vld [vmem:[#allocation8 + $0x2c] sm:$0xf]
    %v1267 = vld [vmem:[#allocation8 + $0x30] sm:$0xf]
    %v1268 = vld [vmem:[#allocation8 + $0x34] sm:$0xf]
    %v1269 = vld [vmem:[#allocation8 + $0x38] sm:$0xf]
    %v1270 = vld [vmem:[#allocation8 + $0x3c] sm:$0xf]
    %v1271 = vld [vmem:[%s6] sm:$0x1]
    %v1273 = vlaneseq
    %v1274 = vshrl.u32 %v1273, 7
    %v1275 = vsub.s32 0, %v1274
    %v1276 = vrot.slane %v1271, %v1275
    %v1294 = vunpack.c.l.b16 %v1255
    %v1295 = vunpack.c.l.b16 %v1256
    %v1296 = vunpack.c.l.b16 %v1257
    %v1297 = vunpack.c.l.b16 %v1258
    %v1298 = vunpack.c.l.b16 %v1259
    %v1299 = vunpack.c.l.b16 %v1260
    %v1300 = vunpack.c.l.b16 %v1261
    %v1301 = vunpack.c.l.b16 %v1262
    %v1302 = vunpack.c.l.b16 %v1263
    %v1303 = vunpack.c.l.b16 %v1264
    %v1304 = vunpack.c.l.b16 %v1265
    %v1305 = vunpack.c.l.b16 %v1266
    %v1306 = vunpack.c.l.b16 %v1267
    %v1307 = vunpack.c.l.b16 %v1268
    %v1308 = vunpack.c.l.b16 %v1269
    %v1309 = vunpack.c.l.b16 %v1270
    %v1310 = vpack.c.b16 %v1295, %v1294
    %v1311 = vpack.c.b16 %v1297, %v1296
    %v1312 = vpack.c.b16 %v1299, %v1298
    %v1313 = vpack.c.b16 %v1301, %v1300
    %v1314 = vpack.c.b16 %v1303, %v1302
    %v1315 = vpack.c.b16 %v1305, %v1304
    %v1316 = vpack.c.b16 %v1307, %v1306
    %v1317 = vpack.c.b16 %v1309, %v1308
    %1326 = vmatprep.subr.bf16.mxu0 0
    %1327 = vmatpush1.bf16.msra.mxu0 %v1310
    %1328 = vmatprep.subr.bf16.mxu0 0
    %1329 = vmatpush1.bf16.msra.mxu0 %v1311
    %1330 = vmatprep.subr.bf16.mxu0 0
    %1331 = vmatpush1.bf16.msra.mxu0 %v1312
    %1332 = vmatprep.subr.bf16.mxu0 0
    %1333 = vmatpush1.bf16.msra.mxu0 %v1313
    %1334 = vmatprep.subr.bf16.mxu0 0
    %1335 = vmatpush1.bf16.msra.mxu0 %v1314
    %1336 = vmatprep.subr.bf16.mxu0 0
    %1337 = vmatpush1.bf16.msra.mxu0 %v1315
    %1338 = vmatprep.subr.bf16.mxu0 0
    %1339 = vmatpush1.bf16.msra.mxu0 %v1316
    %1340 = vmatprep.subr.bf16.mxu0 0
    %1341 = vmatpush1.bf16.msra.mxu0 %v1317
    %1342 = vmatprep.subr.bf16.mxu0 0
    %1343 = vmatpush1.bf16.msra.mxu0 0
    %1344 = vmatprep.subr.bf16.mxu0 0
    %1345 = vmatpush1.bf16.msra.mxu0 0
    %1346 = vmatprep.subr.bf16.mxu0 0
    %1347 = vmatpush1.bf16.msra.mxu0 0
    %1348 = vmatprep.subr.bf16.mxu0 0
    %1349 = vmatpush1.bf16.msra.mxu0 0
    %1350 = vmatprep.subr.bf16.mxu0 0
    %1351 = vmatpush1.bf16.msra.mxu0 0
    %1352 = vmatprep.subr.bf16.mxu0 0
    %1353 = vmatpush1.bf16.msra.mxu0 0
    %1354 = vmatprep.subr.bf16.mxu0 0
    %1355 = vmatpush1.bf16.msra.mxu0 0
    %1356 = vmatprep.subr.bf16.mxu0 0
    %1357 = vmatpush1.bf16.msra.mxu0 0
    %1358 = vmatprep.mubr.bf16.mxu0 0
    %1359 = vmatmul.mubr.bf16.gmra.mrb[0].mxu0 %v1254
    %v1360 = vpop.f32.mrb[0].mxu0
    %v1361 = vadd.f32 %v1276, %v1360
    %v1362 = vpop.f32.mrb[0].mxu0
    %v1363 = vpop.f32.mrb[0].mxu0
    %v1364 = vpop.f32.mrb[0].mxu0
    %1365 = vdwg.mxu0
    %1366 = vst [vmem:[#allocation10] sm:$0x3] %v1361
    // Predicated region
    $region46: #{tpu_custom_call.1} parent=1 // pred_check
      _
    $region47: #{tpu_custom_call.1} parent=1 // pred_check_branch
      %1368 = sbr.rel (0) target = $region49
    $region48: #{tpu_custom_call.1} parent=1 // pred_region
      %s1370 = ssub.s32 32, 32
      %1371 = vsyncadd [#allocation4], %s1370
      %s1373 = sshll.u32 [#allocation10], 4
      %s1374 = int_to_ptr.vmem [resolvable:$true] %s1373
      %1376 = dma.vmem_to_hbm [thread:$0]  %s1374, 32, %s7, [#allocation4]
    $region49: #{tpu_custom_call.1} parent=1 // pred_fallthru
      _
    // Predicated region
    $region50: #{tpu_custom_call.1} parent=1 // pred_check
      _
    $region51: #{tpu_custom_call.1} parent=1 // pred_check_branch
      %1378 = sbr.rel (0) target = $region53
    $region52: #{tpu_custom_call.1} parent=1 // pred_region
      %1379 = dma.done [#allocation4], 32
    $region53: #{tpu_custom_call.1} parent=1 // pred_fallthru
      _
    %1380 = vsyncpa [#allocation3], 1
    %1381 = vsyncpa [#allocation6], 1
    %1382 = vsyncpa [#allocation9], 1
    %1383 = vsyncpa [#allocation4], 1

</llo_original>
